<compile_context>
chip_gen: v6e
topology: v6e:2x2x1
jax: 0.10.0
libtpu: 0.0.40
codegen_flags: <defaults>
</compile_context>

<pallas_src>
from functools import partial

import jax
import jax.numpy as jnp
from jax.experimental import pallas as pl
from jax.experimental.pallas import tpu as pltpu

RESNET_DIM = 64    # resnet_dim
NUM_BLOCKS = 3     # num_resnet_blocks
OUT_DIM = 32       # out_dim
BATCH = 256        # example batch; splits into 2 tiles of 128 -> both v7x TCs busy


def _round_up(x, m):
    return ((x + m - 1) // m) * m


def _pick_tile(batch):
    """Batch tile: one tile for tiny batches, else >=2 tiles of <=1024 rows."""
    b8 = _round_up(batch, 8)
    if b8 <= 128:
        return b8
    return min(1024, _round_up((b8 + 1) // 2, 8))


def _use_bf16_vpu():
    """bf16 elementwise is native on v6e/v7x VPUs; keep f32 VPU work on <= v5e."""
    try:
        kind = jax.devices()[0].device_kind.lower()
    except Exception:  # pragma: no cover - defensive
        return False
    return not any(tag in kind for tag in ("v2", "v3", "v4", "v5"))


def resnet_kernel(x_ref, w_ref, b_ref, wout_ref, bout_ref, o_ref, *,
                  num_blocks, bf16_vpu):
    # x_ref    : (TB, D)        f32 activation tile
    # w_ref    : (NB, 2, D, D)  bf16 per-block linear weights, (in, out) layout
    # b_ref    : (NB*2, D)      f32 per-block biases (flattened)
    # wout_ref : (D, OUT_DIM)   bf16 fc_out weight
    # bout_ref : (1, OUT_DIM)   f32 fc_out bias
    # o_ref    : (TB, OUT_DIM)  f32 output tile (only real lanes stored)
    cdt = jnp.bfloat16 if bf16_vpu else jnp.float32
    # FullyConnectedModel does x.float(); on v6e/v7x we then keep the VPU work
    # (bias add, ReLU, residual) in bf16.
    x = x_ref[...].astype(cdt)
    for blk in range(num_blocks):                       # static unroll over blocks
        res = x
        # layer 1: Linear + ReLU  (bf16 MXU operands, f32 accumulation)
        h = jnp.dot(x.astype(jnp.bfloat16), w_ref[blk, 0],
                    preferred_element_type=jnp.float32).astype(cdt)
        h = jnp.maximum(h + b_ref[2 * blk:2 * blk + 1, :].astype(cdt), 0.0)
        # layer 2: Linear + LINEAR act
        h = jnp.dot(h.astype(jnp.bfloat16), w_ref[blk, 1],
                    preferred_element_type=jnp.float32).astype(cdt)
        h = h + b_ref[2 * blk + 1:2 * blk + 2, :].astype(cdt)
        # residual add, then block activation (ReLU)
        x = jnp.maximum(h + res, 0.0)
    # fc_out in f32: storing only out_dim lanes quarters the dominant HBM write
    # compared to a 128-lane f32 pad (masked store accepted).
    o_ref[...] = (jnp.dot(x.astype(jnp.bfloat16), wout_ref[...],
                          preferred_element_type=jnp.float32)
                  + bout_ref[...])


def prepare_params(w_blocks, b_blocks, w_out, b_out):
    """One-time parameter prep, hoisted off the per-call path.

    w_blocks: (NB, 2, D, D) f32, (in, out) layout.   b_blocks: (NB, 2, 1, D) f32.
    w_out:    (D, out_dim) f32.                      b_out:    (1, out_dim) f32.
    """
    nb, _, d, _ = w_blocks.shape
    w_b = jnp.asarray(w_blocks, jnp.float32).astype(jnp.bfloat16)
    b_b = jnp.asarray(b_blocks, jnp.float32).reshape(nb * 2, d)
    w_o = jnp.asarray(w_out, jnp.float32).astype(jnp.bfloat16)
    b_o = jnp.asarray(b_out, jnp.float32)
    return w_b, b_b, w_o, b_o


@partial(jax.jit, static_argnames=("tb", "bf16_vpu"))
def _resnet_forward_impl(x, w_b, b_b, w_o, b_o, *, tb, bf16_vpu):
    B, D = x.shape
    nb = w_b.shape[0]
    out_dim = w_o.shape[1]

    Bp = _round_up(B, tb)
    if Bp != B:
        x = jnp.pad(x, ((0, Bp - B), (0, 0)))

    flops = 2 * Bp * D * D * 2 * nb + 2 * Bp * D * out_dim
    bytes_accessed = (Bp * D * 4 + Bp * out_dim * 4
                      + w_b.size * 2 + b_b.size * 4 + w_o.size * 2 + b_o.size * 4)

    kernel = partial(resnet_kernel, num_blocks=nb, bf16_vpu=bf16_vpu)
    out = pl.pallas_call(
        kernel,
        out_shape=jax.ShapeDtypeStruct((Bp, out_dim), jnp.float32),
        grid_spec=pltpu.PrefetchScalarGridSpec(
            num_scalar_prefetch=0,
            grid=(Bp // tb,),
            in_specs=[
                pl.BlockSpec((tb, D), lambda i: (i, 0)),            # x tile
                pl.BlockSpec(w_b.shape, lambda i: (0, 0, 0, 0)),    # block weights (resident)
                pl.BlockSpec(b_b.shape, lambda i: (0, 0)),          # block biases (resident)
                pl.BlockSpec(w_o.shape, lambda i: (0, 0)),          # fc_out weight (resident)
                pl.BlockSpec(b_o.shape, lambda i: (0, 0)),          # fc_out bias (resident)
            ],
            out_specs=pl.BlockSpec((tb, out_dim), lambda i: (i, 0)),
        ),
        compiler_params=pltpu.CompilerParams(
            dimension_semantics=("parallel",)),
        cost_estimate=pl.CostEstimate(flops=int(flops), transcendentals=0,
                                      bytes_accessed=int(bytes_accessed)),
    )(x, w_b, b_b, w_o, b_o)
    return out[:B] if Bp != B else out


def resnet_forward(x, prepared_params, *, bf16_vpu=None):
    if bf16_vpu is None:
        bf16_vpu = _use_bf16_vpu()
    tb = _pick_tile(x.shape[0])
    return _resnet_forward_impl(x, *prepared_params, tb=tb, bf16_vpu=bf16_vpu)


if __name__ == "__main__":
    key = jax.random.PRNGKey(0)
    k_wb, k_bb, k_wo, k_bo, k_x = jax.random.split(key, 5)

    # Deterministic PyTorch-Linear-style init: U(-1/sqrt(fan_in), 1/sqrt(fan_in)).
    bound = 1.0 / (RESNET_DIM ** 0.5)
    w_blocks = jax.random.uniform(
        k_wb, (NUM_BLOCKS, 2, RESNET_DIM, RESNET_DIM), jnp.float32, -bound, bound)
    b_blocks = jax.random.uniform(
        k_bb, (NUM_BLOCKS, 2, 1, RESNET_DIM), jnp.float32, -bound, bound)
    w_out = jax.random.uniform(
        k_wo, (RESNET_DIM, OUT_DIM), jnp.float32, -bound, bound)
    b_out = jax.random.uniform(
        k_bo, (1, OUT_DIM), jnp.float32, -bound, bound)

    x = jax.random.normal(k_x, (BATCH, RESNET_DIM), jnp.float32)

    bf16_vpu = _use_bf16_vpu()
    params = prepare_params(w_blocks, b_blocks, w_out, b_out)   # hoisted, runs once
    out = jax.block_until_ready(resnet_forward(x, params, bf16_vpu=bf16_vpu))

    # Pure-JAX reference mirroring the kernel's math (bf16 MXU operands, f32
    # accumulation, and the same compute dtype for the elementwise path).
    def ref_forward(xin):
        cdt = jnp.bfloat16 if bf16_vpu else jnp.float32
        wb = w_blocks.astype(jnp.bfloat16)
        wo = w_out.astype(jnp.bfloat16)
        h = xin.astype(jnp.float32).astype(cdt)
        for blk in range(NUM_BLOCKS):
            r = h
            y = jnp.dot(h.astype(jnp.bfloat16), wb[blk, 0],
                        preferred_element_type=jnp.float32).astype(cdt)
            y = jnp.maximum(y + b_blocks[blk, 0].astype(cdt), 0.0)
            y = jnp.dot(y.astype(jnp.bfloat16), wb[blk, 1],
                        preferred_element_type=jnp.float32).astype(cdt)
            y = y + b_blocks[blk, 1].astype(cdt)
            h = jnp.maximum(y + r, 0.0)
        return (jnp.dot(h.astype(jnp.bfloat16), wo,
                        preferred_element_type=jnp.float32) + b_out)

    expected = ref_forward(x)
    assert out.shape == (BATCH, OUT_DIM)
    assert jnp.allclose(out, expected, atol=2e-2, rtol=2e-2), "mismatch vs reference"

    print("KERNEL_OK")
</pallas_src>

<mosaic_0001>
module attributes {stable_mosaic.version = 11 : i64} {
  func.func @resnet_kernel(%arg0: i32, %arg1: memref<128x64xf32, #tpu.memory_space<vmem>>, %arg2: memref<3x2x64x64xbf16, #tpu.memory_space<vmem>>, %arg3: memref<6x64xf32, #tpu.memory_space<vmem>>, %arg4: memref<64x32xbf16, #tpu.memory_space<vmem>>, %arg5: memref<1x32xf32, #tpu.memory_space<vmem>>, %arg6: memref<128x32xf32, #tpu.memory_space<vmem>>) attributes {dimension_semantics = [#tpu.dimension_semantics<parallel>], iteration_bounds = array<i64: 2>, scalar_prefetch = 0 : i64, scratch_operands = 0 : i64, tpu.core_type = #tpu.core_type<tc>, window_params = [{transform_indices = @transform_0, window_bounds = array<i64: 128, 64>}, {pipeline_mode = #tpu.pipeline_mode<synchronous>, transform_indices = @transform_1, window_bounds = array<i64: 3, 2, 64, 64>}, {pipeline_mode = #tpu.pipeline_mode<synchronous>, transform_indices = @transform_2, window_bounds = array<i64: 6, 64>}, {pipeline_mode = #tpu.pipeline_mode<synchronous>, transform_indices = @transform_3, window_bounds = array<i64: 64, 32>}, {pipeline_mode = #tpu.pipeline_mode<synchronous>, transform_indices = @transform_4, window_bounds = array<i64: 1, 32>}, {transform_indices = @transform_5, window_bounds = array<i64: 128, 32>}]} {
    %c0 = arith.constant 0 : index
    %c0_0 = arith.constant 0 : index
    %0 = vector.load %arg1[%c0, %c0_0] : memref<128x64xf32, #tpu.memory_space<vmem>>, vector<128x64xf32>
    %1 = arith.truncf %0 : vector<128x64xf32> to vector<128x64xbf16>
    %c0_1 = arith.constant 0 : index
    %c0_2 = arith.constant 0 : index
    %c0_3 = arith.constant 0 : index
    %c0_4 = arith.constant 0 : index
    %2 = vector.load %arg2[%c0_1, %c0_2, %c0_3, %c0_4] : memref<3x2x64x64xbf16, #tpu.memory_space<vmem>>, vector<1x1x64x64xbf16>
    %3 = vector.shape_cast %2 : vector<1x1x64x64xbf16> to vector<64x64xbf16>
    %cst = arith.constant dense<0.000000e+00> : vector<128x64xf32>
    %4 = tpu.matmul %1, %3, %cst {dimension_numbers = #tpu.dot_dimension_numbers<[1], [0], [0], [1], [0, 0, 1, 1], [], []>} : vector<128x64xbf16>, vector<64x64xbf16>, vector<128x64xf32> -> vector<128x64xf32>
    %5 = arith.truncf %4 : vector<128x64xf32> to vector<128x64xbf16>
    %c0_5 = arith.constant 0 : index
    %c0_6 = arith.constant 0 : index
    %6 = vector.load %arg3[%c0_5, %c0_6] : memref<6x64xf32, #tpu.memory_space<vmem>>, vector<1x64xf32>
    %7 = arith.truncf %6 : vector<1x64xf32> to vector<1x64xbf16>
    %8 = vector.broadcast %7 : vector<1x64xbf16> to vector<128x64xbf16>
    %9 = arith.addf %5, %8 : vector<128x64xbf16>
    %cst_7 = arith.constant 0.000000e+00 : bf16
    %10 = vector.broadcast %cst_7 : bf16 to vector<128x64xbf16>
    %11 = arith.maximumf %9, %10 : vector<128x64xbf16>
    %c0_8 = arith.constant 0 : index
    %c1 = arith.constant 1 : index
    %c0_9 = arith.constant 0 : index
    %c0_10 = arith.constant 0 : index
    %12 = vector.load %arg2[%c0_8, %c1, %c0_9, %c0_10] : memref<3x2x64x64xbf16, #tpu.memory_space<vmem>>, vector<1x1x64x64xbf16>
    %13 = vector.shape_cast %12 : vector<1x1x64x64xbf16> to vector<64x64xbf16>
    %cst_11 = arith.constant dense<0.000000e+00> : vector<128x64xf32>
    %14 = tpu.matmul %11, %13, %cst_11 {dimension_numbers = #tpu.dot_dimension_numbers<[1], [0], [0], [1], [0, 0, 1, 1], [], []>} : vector<128x64xbf16>, vector<64x64xbf16>, vector<128x64xf32> -> vector<128x64xf32>
    %15 = arith.truncf %14 : vector<128x64xf32> to vector<128x64xbf16>
    %c1_12 = arith.constant 1 : index
    %c0_13 = arith.constant 0 : index
    %16 = vector.load %arg3[%c1_12, %c0_13] : memref<6x64xf32, #tpu.memory_space<vmem>>, vector<1x64xf32>
    %17 = arith.truncf %16 : vector<1x64xf32> to vector<1x64xbf16>
    %18 = vector.broadcast %17 : vector<1x64xbf16> to vector<128x64xbf16>
    %19 = arith.addf %15, %18 : vector<128x64xbf16>
    %20 = arith.addf %19, %1 : vector<128x64xbf16>
    %cst_14 = arith.constant 0.000000e+00 : bf16
    %21 = vector.broadcast %cst_14 : bf16 to vector<128x64xbf16>
    %22 = arith.maximumf %20, %21 : vector<128x64xbf16>
    %c1_15 = arith.constant 1 : index
    %c0_16 = arith.constant 0 : index
    %c0_17 = arith.constant 0 : index
    %c0_18 = arith.constant 0 : index
    %23 = vector.load %arg2[%c1_15, %c0_16, %c0_17, %c0_18] : memref<3x2x64x64xbf16, #tpu.memory_space<vmem>>, vector<1x1x64x64xbf16>
    %24 = vector.shape_cast %23 : vector<1x1x64x64xbf16> to vector<64x64xbf16>
    %cst_19 = arith.constant dense<0.000000e+00> : vector<128x64xf32>
    %25 = tpu.matmul %22, %24, %cst_19 {dimension_numbers = #tpu.dot_dimension_numbers<[1], [0], [0], [1], [0, 0, 1, 1], [], []>} : vector<128x64xbf16>, vector<64x64xbf16>, vector<128x64xf32> -> vector<128x64xf32>
    %26 = arith.truncf %25 : vector<128x64xf32> to vector<128x64xbf16>
    %c2 = arith.constant 2 : index
    %c0_20 = arith.constant 0 : index
    %27 = vector.load %arg3[%c2, %c0_20] : memref<6x64xf32, #tpu.memory_space<vmem>>, vector<1x64xf32>
    %28 = arith.truncf %27 : vector<1x64xf32> to vector<1x64xbf16>
    %29 = vector.broadcast %28 : vector<1x64xbf16> to vector<128x64xbf16>
    %30 = arith.addf %26, %29 : vector<128x64xbf16>
    %cst_21 = arith.constant 0.000000e+00 : bf16
    %31 = vector.broadcast %cst_21 : bf16 to vector<128x64xbf16>
    %32 = arith.maximumf %30, %31 : vector<128x64xbf16>
    %c1_22 = arith.constant 1 : index
    %c1_23 = arith.constant 1 : index
    %c0_24 = arith.constant 0 : index
    %c0_25 = arith.constant 0 : index
    %33 = vector.load %arg2[%c1_22, %c1_23, %c0_24, %c0_25] : memref<3x2x64x64xbf16, #tpu.memory_space<vmem>>, vector<1x1x64x64xbf16>
    %34 = vector.shape_cast %33 : vector<1x1x64x64xbf16> to vector<64x64xbf16>
    %cst_26 = arith.constant dense<0.000000e+00> : vector<128x64xf32>
    %35 = tpu.matmul %32, %34, %cst_26 {dimension_numbers = #tpu.dot_dimension_numbers<[1], [0], [0], [1], [0, 0, 1, 1], [], []>} : vector<128x64xbf16>, vector<64x64xbf16>, vector<128x64xf32> -> vector<128x64xf32>
    %36 = arith.truncf %35 : vector<128x64xf32> to vector<128x64xbf16>
    %c3 = arith.constant 3 : index
    %c0_27 = arith.constant 0 : index
    %37 = vector.load %arg3[%c3, %c0_27] : memref<6x64xf32, #tpu.memory_space<vmem>>, vector<1x64xf32>
    %38 = arith.truncf %37 : vector<1x64xf32> to vector<1x64xbf16>
    %39 = vector.broadcast %38 : vector<1x64xbf16> to vector<128x64xbf16>
    %40 = arith.addf %36, %39 : vector<128x64xbf16>
    %41 = arith.addf %40, %22 : vector<128x64xbf16>
    %cst_28 = arith.constant 0.000000e+00 : bf16
    %42 = vector.broadcast %cst_28 : bf16 to vector<128x64xbf16>
    %43 = arith.maximumf %41, %42 : vector<128x64xbf16>
    %c2_29 = arith.constant 2 : index
    %c0_30 = arith.constant 0 : index
    %c0_31 = arith.constant 0 : index
    %c0_32 = arith.constant 0 : index
    %44 = vector.load %arg2[%c2_29, %c0_30, %c0_31, %c0_32] : memref<3x2x64x64xbf16, #tpu.memory_space<vmem>>, vector<1x1x64x64xbf16>
    %45 = vector.shape_cast %44 : vector<1x1x64x64xbf16> to vector<64x64xbf16>
    %cst_33 = arith.constant dense<0.000000e+00> : vector<128x64xf32>
    %46 = tpu.matmul %43, %45, %cst_33 {dimension_numbers = #tpu.dot_dimension_numbers<[1], [0], [0], [1], [0, 0, 1, 1], [], []>} : vector<128x64xbf16>, vector<64x64xbf16>, vector<128x64xf32> -> vector<128x64xf32>
    %47 = arith.truncf %46 : vector<128x64xf32> to vector<128x64xbf16>
    %c4 = arith.constant 4 : index
    %c0_34 = arith.constant 0 : index
    %48 = vector.load %arg3[%c4, %c0_34] : memref<6x64xf32, #tpu.memory_space<vmem>>, vector<1x64xf32>
    %49 = arith.truncf %48 : vector<1x64xf32> to vector<1x64xbf16>
    %50 = vector.broadcast %49 : vector<1x64xbf16> to vector<128x64xbf16>
    %51 = arith.addf %47, %50 : vector<128x64xbf16>
    %cst_35 = arith.constant 0.000000e+00 : bf16
    %52 = vector.broadcast %cst_35 : bf16 to vector<128x64xbf16>
    %53 = arith.maximumf %51, %52 : vector<128x64xbf16>
    %c2_36 = arith.constant 2 : index
    %c1_37 = arith.constant 1 : index
    %c0_38 = arith.constant 0 : index
    %c0_39 = arith.constant 0 : index
    %54 = vector.load %arg2[%c2_36, %c1_37, %c0_38, %c0_39] : memref<3x2x64x64xbf16, #tpu.memory_space<vmem>>, vector<1x1x64x64xbf16>
    %55 = vector.shape_cast %54 : vector<1x1x64x64xbf16> to vector<64x64xbf16>
    %cst_40 = arith.constant dense<0.000000e+00> : vector<128x64xf32>
    %56 = tpu.matmul %53, %55, %cst_40 {dimension_numbers = #tpu.dot_dimension_numbers<[1], [0], [0], [1], [0, 0, 1, 1], [], []>} : vector<128x64xbf16>, vector<64x64xbf16>, vector<128x64xf32> -> vector<128x64xf32>
    %57 = arith.truncf %56 : vector<128x64xf32> to vector<128x64xbf16>
    %c5 = arith.constant 5 : index
    %c0_41 = arith.constant 0 : index
    %58 = vector.load %arg3[%c5, %c0_41] : memref<6x64xf32, #tpu.memory_space<vmem>>, vector<1x64xf32>
    %59 = arith.truncf %58 : vector<1x64xf32> to vector<1x64xbf16>
    %60 = vector.broadcast %59 : vector<1x64xbf16> to vector<128x64xbf16>
    %61 = arith.addf %57, %60 : vector<128x64xbf16>
    %62 = arith.addf %61, %43 : vector<128x64xbf16>
    %cst_42 = arith.constant 0.000000e+00 : bf16
    %63 = vector.broadcast %cst_42 : bf16 to vector<128x64xbf16>
    %64 = arith.maximumf %62, %63 : vector<128x64xbf16>
    %c0_43 = arith.constant 0 : index
    %c0_44 = arith.constant 0 : index
    %65 = vector.load %arg4[%c0_43, %c0_44] : memref<64x32xbf16, #tpu.memory_space<vmem>>, vector<64x32xbf16>
    %cst_45 = arith.constant dense<0.000000e+00> : vector<128x32xf32>
    %66 = tpu.matmul %64, %65, %cst_45 {dimension_numbers = #tpu.dot_dimension_numbers<[1], [0], [0], [1], [0, 0, 1, 1], [], []>} : vector<128x64xbf16>, vector<64x32xbf16>, vector<128x32xf32> -> vector<128x32xf32>
    %c0_46 = arith.constant 0 : index
    %c0_47 = arith.constant 0 : index
    %67 = vector.load %arg5[%c0_46, %c0_47] : memref<1x32xf32, #tpu.memory_space<vmem>>, vector<1x32xf32>
    %68 = vector.broadcast %67 : vector<1x32xf32> to vector<128x32xf32>
    %69 = arith.addf %66, %68 : vector<128x32xf32>
    %c0_48 = arith.constant 0 : index
    %c0_49 = arith.constant 0 : index
    %70 = vector.load %arg6[%c0_48, %c0_49] : memref<128x32xf32, #tpu.memory_space<vmem>>, vector<128x32xf32>
    tpu.vector_store %arg6[%c0_48, %c0_49], %69 {strides = array<i32>} : memref<128x32xf32, #tpu.memory_space<vmem>>, vector<128x32xf32>,
    return
  }
  func.func @transform_0(%arg0: i32) -> (i32, i32) {
    %c0_i32 = arith.constant 0 : i32
    %c0_i32_0 = arith.constant 0 : i32
    return %arg0, %c0_i32 : i32, i32
  }
  func.func @transform_1(%arg0: i32) -> (i32, i32, i32, i32) {
    %c0_i32 = arith.constant 0 : i32
    %c0_i32_0 = arith.constant 0 : i32
    %c0_i32_1 = arith.constant 0 : i32
    %c0_i32_2 = arith.constant 0 : i32
    %c0_i32_3 = arith.constant 0 : i32
    return %c0_i32, %c0_i32_0, %c0_i32_1, %c0_i32_2 : i32, i32, i32, i32
  }
  func.func @transform_2(%arg0: i32) -> (i32, i32) {
    %c0_i32 = arith.constant 0 : i32
    %c0_i32_0 = arith.constant 0 : i32
    %c0_i32_1 = arith.constant 0 : i32
    return %c0_i32, %c0_i32_0 : i32, i32
  }
  func.func @transform_3(%arg0: i32) -> (i32, i32) {
    %c0_i32 = arith.constant 0 : i32
    %c0_i32_0 = arith.constant 0 : i32
    %c0_i32_1 = arith.constant 0 : i32
    return %c0_i32, %c0_i32_0 : i32, i32
  }
  func.func @transform_4(%arg0: i32) -> (i32, i32) {
    %c0_i32 = arith.constant 0 : i32
    %c0_i32_0 = arith.constant 0 : i32
    %c0_i32_1 = arith.constant 0 : i32
    return %c0_i32, %c0_i32_0 : i32, i32
  }
  func.func @transform_5(%arg0: i32) -> (i32, i32) {
    %c0_i32 = arith.constant 0 : i32
    %c0_i32_0 = arith.constant 0 : i32
    return %arg0, %c0_i32 : i32, i32
  }
}

</mosaic_0001>

<llo_original>
// kernel: _resnet_forward_impl.1
$region0: #{_resnet_forward_impl.1}
  #allocation0 [shape = 'u32[]', space=smem, size = 0x4, offset = 0x4, fixed_abs, tag = 'smem constant byte address 0x4 - core index']
  #allocation1 [shape = 'u32[144,128]{1,0:T(1,128)}', space=vmem, size = 0x12000, scoped, tag = 'internal scratch']
  %s0 = inlined_call_operand.vmem [shape: f32[256,64], index: 0, kind: input, shape index: {}]
  %s1 = inlined_call_operand.vmem [shape: bf16[3,2,64,64], index: 1, kind: input, shape index: {}]
  %s2 = inlined_call_operand.vmem [shape: f32[6,64], index: 2, kind: input, shape index: {}]
  %s3 = inlined_call_operand.vmem [shape: bf16[64,32], index: 3, kind: input, shape index: {}]
  %s4 = inlined_call_operand.vmem [shape: f32[1,32], index: 4, kind: input, shape index: {}]
  %s5 = inlined_call_operand.vmem [shape: f32[256,32], index: 5, kind: output, shape index: {}]
  %s6 = sld [smem:[#allocation0]]
  $region53: #{_resnet_forward_impl.1} parent=0
    _
  %s8 = ssub.s32 1, %s6
  %s9 = scalar_select 0, %s8, %s6
  loop: start=0, step=1, limit=4
  $region2: #{_resnet_forward_impl.1} parent=0 // loop_pre_header
    _
  $region3: #{_resnet_forward_impl.1} parent=0 // loop_header
    %s11 = sphi 0, %s15
    %p12 = scmp.ge.s32.totalorder %s11, 4
    %s21 = sphi 0, %s23
    %s24 = sphi 0, %s21
    %s25 = sphi 0, %s24
    %s41 = sphi 0, %s25
    %s45 = sphi 0, %s45
    %s47 = sphi 0, %s45
    %s48 = sphi 0, %s47
    %s62 = sphi 0, %s48
    %s66 = sphi 0, %s66
    %s68 = sphi 0, %s66
    %s69 = sphi 0, %s68
    %s83 = sphi 0, %s69
    %s87 = sphi 0, %s87
    %s89 = sphi 0, %s87
    %s90 = sphi 0, %s89
    %s104 = sphi 0, %s90
    %s108 = sphi 0, %s108
    %s110 = sphi 0, %s108
    %s111 = sphi 0, %s110
    %s125 = sphi 0, %s111
    %s131 = sphi 0, %s133
    %s134 = sphi 0, %s131
    %s135 = sphi 0, %s134
    %s151 = sphi 0, %s135
  $region4: #{_resnet_forward_impl.1} parent=0 // loop_header_branch
    %14 = sbr.rel (%p12) target = $region8
  $region5: #{_resnet_forward_impl.1} parent=0 // loop_body
    %s16 = ssub.s32 %s11, 1
    %s17 = ssub.s32 %s11, 2
    %s18 = sadd.s32 %s11, 1
    %s19 = ssub.s32 %s11, %s18
    %p20 = scmp.eq.s32.totalorder %s19, 0
    %s22 = sadd.s32 %s21, 1
    %s23 = scalar_select %p20, %s21, %s22
    %p26 = pneg %p20
    %p27 = scmp.eq.s32.totalorder %s11, 1
    %p28 = por %p26, %p27
    %p29 = scmp.ne.s32.totalorder %s21, %s24
    %p30 = scmp.eq.s32.totalorder %s11, 0
    %p31 = por %p29, %p30
    %p32 = scmp.ne.s32.totalorder %s21, %s24
    %p33 = scmp.eq.s32.totalorder %s16, 1
    %p34 = por %p32, %p33
    %p35 = scmp.ne.s32.totalorder %s24, %s25
    %p36 = scmp.eq.s32.totalorder %s16, 0
    %p37 = por %p35, %p36
    %p38 = scmp.ne.s32.totalorder %s24, %s25
    %p39 = scmp.eq.s32.totalorder %s17, 1
    %p40 = por %p38, %p39
    %p42 = scmp.ne.s32.totalorder %s25, %s41
    %p43 = scmp.eq.s32.totalorder %s17, 0
    %p44 = por %p42, %p43
    %s46 = sadd.s32 %s45, 1
    %p49 = scmp.eq.s32.totalorder %s11, 1
    %p50 = scmp.ne.s32.totalorder %s45, %s47
    %p51 = scmp.eq.s32.totalorder %s11, 0
    %p52 = por %p50, %p51
    %p53 = scmp.ne.s32.totalorder %s45, %s47
    %p54 = scmp.eq.s32.totalorder %s16, 1
    %p55 = por %p53, %p54
    %p56 = scmp.ne.s32.totalorder %s47, %s48
    %p57 = scmp.eq.s32.totalorder %s16, 0
    %p58 = por %p56, %p57
    %p59 = scmp.ne.s32.totalorder %s47, %s48
    %p60 = scmp.eq.s32.totalorder %s17, 1
    %p61 = por %p59, %p60
    %p63 = scmp.ne.s32.totalorder %s48, %s62
    %p64 = scmp.eq.s32.totalorder %s17, 0
    %p65 = por %p63, %p64
    %s67 = sadd.s32 %s66, 1
    %p70 = scmp.eq.s32.totalorder %s11, 1
    %p71 = scmp.ne.s32.totalorder %s66, %s68
    %p72 = scmp.eq.s32.totalorder %s11, 0
    %p73 = por %p71, %p72
    %p74 = scmp.ne.s32.totalorder %s66, %s68
    %p75 = scmp.eq.s32.totalorder %s16, 1
    %p76 = por %p74, %p75
    %p77 = scmp.ne.s32.totalorder %s68, %s69
    %p78 = scmp.eq.s32.totalorder %s16, 0
    %p79 = por %p77, %p78
    %p80 = scmp.ne.s32.totalorder %s68, %s69
    %p81 = scmp.eq.s32.totalorder %s17, 1
    %p82 = por %p80, %p81
    %p84 = scmp.ne.s32.totalorder %s69, %s83
    %p85 = scmp.eq.s32.totalorder %s17, 0
    %p86 = por %p84, %p85
    %s88 = sadd.s32 %s87, 1
    %p91 = scmp.eq.s32.totalorder %s11, 1
    %p92 = scmp.ne.s32.totalorder %s87, %s89
    %p93 = scmp.eq.s32.totalorder %s11, 0
    %p94 = por %p92, %p93
    %p95 = scmp.ne.s32.totalorder %s87, %s89
    %p96 = scmp.eq.s32.totalorder %s16, 1
    %p97 = por %p95, %p96
    %p98 = scmp.ne.s32.totalorder %s89, %s90
    %p99 = scmp.eq.s32.totalorder %s16, 0
    %p100 = por %p98, %p99
    %p101 = scmp.ne.s32.totalorder %s89, %s90
    %p102 = scmp.eq.s32.totalorder %s17, 1
    %p103 = por %p101, %p102
    %p105 = scmp.ne.s32.totalorder %s90, %s104
    %p106 = scmp.eq.s32.totalorder %s17, 0
    %p107 = por %p105, %p106
    %s109 = sadd.s32 %s108, 1
    %p112 = scmp.eq.s32.totalorder %s11, 1
    %p113 = scmp.ne.s32.totalorder %s108, %s110
    %p114 = scmp.eq.s32.totalorder %s11, 0
    %p115 = por %p113, %p114
    %p116 = scmp.ne.s32.totalorder %s108, %s110
    %p117 = scmp.eq.s32.totalorder %s16, 1
    %p118 = por %p116, %p117
    %p119 = scmp.ne.s32.totalorder %s110, %s111
    %p120 = scmp.eq.s32.totalorder %s16, 0
    %p121 = por %p119, %p120
    %p122 = scmp.ne.s32.totalorder %s110, %s111
    %p123 = scmp.eq.s32.totalorder %s17, 1
    %p124 = por %p122, %p123
    %p126 = scmp.ne.s32.totalorder %s111, %s125
    %p127 = scmp.eq.s32.totalorder %s17, 0
    %p128 = por %p126, %p127
    %s129 = ssub.s32 %s11, %s18
    %p130 = scmp.eq.s32.totalorder %s129, 0
    %s132 = sadd.s32 %s131, 1
    %s133 = scalar_select %p130, %s131, %s132
    %p136 = pneg %p130
    %p137 = scmp.eq.s32.totalorder %s11, 1
    %p138 = por %p136, %p137
    %p139 = scmp.ne.s32.totalorder %s131, %s134
    %p140 = scmp.eq.s32.totalorder %s11, 0
    %p141 = por %p139, %p140
    %p142 = scmp.ne.s32.totalorder %s131, %s134
    %p143 = scmp.eq.s32.totalorder %s16, 1
    %p144 = por %p142, %p143
    %p145 = scmp.ne.s32.totalorder %s134, %s135
    %p146 = scmp.eq.s32.totalorder %s16, 0
    %p147 = por %p145, %p146
    %p148 = scmp.ne.s32.totalorder %s134, %s135
    %p149 = scmp.eq.s32.totalorder %s17, 1
    %p150 = por %p148, %p149
    %p152 = scmp.ne.s32.totalorder %s135, %s151
    %p153 = scmp.eq.s32.totalorder %s17, 0
    %p154 = por %p152, %p153
    %p155 = scmp.le.s32.totalorder 1, %s11
    %p156 = scmp.lt.s32.totalorder %s11, 3
    %p157 = pnand %p155, %p156
    %p158 = pneg %p157
    // Predicated region
    $region9: #{_resnet_forward_impl.1} parent=5 // pred_check
      _
    $region10: #{_resnet_forward_impl.1} parent=5 // pred_check_branch
      %160 = sbr.rel (%p157) target = $region12
    $region11: #{_resnet_forward_impl.1} parent=5 // pred_region
      %s161 = ssub.s32 %s11, 1
      // Predicated region
      $region13: #{_resnet_forward_impl.1} parent=11 // pred_check
        %p162 = pneg %p58
      $region14: #{_resnet_forward_impl.1} parent=11 // pred_check_branch
        %164 = sbr.rel (%p162) target = $region16
      $region15: #{_resnet_forward_impl.1} parent=11 // pred_region
        _
      $region16: #{_resnet_forward_impl.1} parent=11 // pred_fallthru
        _
      // Predicated region
      $region17: #{_resnet_forward_impl.1} parent=11 // pred_check
        %p165 = pneg %p79
      $region18: #{_resnet_forward_impl.1} parent=11 // pred_check_branch
        %167 = sbr.rel (%p165) target = $region20
      $region19: #{_resnet_forward_impl.1} parent=11 // pred_region
        _
      $region20: #{_resnet_forward_impl.1} parent=11 // pred_fallthru
        _
      // Predicated region
      $region21: #{_resnet_forward_impl.1} parent=11 // pred_check
        %p168 = pneg %p100
      $region22: #{_resnet_forward_impl.1} parent=11 // pred_check_branch
        %170 = sbr.rel (%p168) target = $region24
      $region23: #{_resnet_forward_impl.1} parent=11 // pred_region
        _
      $region24: #{_resnet_forward_impl.1} parent=11 // pred_fallthru
        _
      // Predicated region
      $region25: #{_resnet_forward_impl.1} parent=11 // pred_check
        %p171 = pneg %p121
      $region26: #{_resnet_forward_impl.1} parent=11 // pred_check_branch
        %173 = sbr.rel (%p171) target = $region28
      $region27: #{_resnet_forward_impl.1} parent=11 // pred_region
        _
      $region28: #{_resnet_forward_impl.1} parent=11 // pred_fallthru
        _
    $region12: #{_resnet_forward_impl.1} parent=5 // pred_fallthru
      _
    %p174 = scmp.lt.s32.totalorder %s11, 2
    // Predicated region
    $region29: #{_resnet_forward_impl.1} parent=5 // pred_check
      %p175 = pneg %p174
    $region30: #{_resnet_forward_impl.1} parent=5 // pred_check_branch
      %177 = sbr.rel (%p175) target = $region32
    $region31: #{_resnet_forward_impl.1} parent=5 // pred_region
      // Predicated region
      $region33: #{_resnet_forward_impl.1} parent=31 // pred_check
        %p178 = pneg %p31
      $region34: #{_resnet_forward_impl.1} parent=31 // pred_check_branch
        %180 = sbr.rel (%p178) target = $region36
      $region35: #{_resnet_forward_impl.1} parent=31 // pred_region
        %s181 = smul.u32 16, %s11
        %p182 = scmp.lt.s32.totalorder %s181, 31
        %s183 = scalar_select %p182, %s181, 31
        %s184 = smul.addr %s183, 8
        %s185 = scalar_lea.vmem %s0, %s184
        %s186 = smul.u32 16, %s11
      $region36: #{_resnet_forward_impl.1} parent=31 // pred_fallthru
        _
    $region32: #{_resnet_forward_impl.1} parent=5 // pred_fallthru
      _
    %p187 = scmp.le.s32.totalorder 1, %s11
    %p188 = scmp.lt.s32.totalorder %s11, 3
    %p189 = pnand %p187, %p188
    %p190 = pneg %p189
    // Predicated region
    $region37: #{_resnet_forward_impl.1} parent=5 // pred_check
      _
    $region38: #{_resnet_forward_impl.1} parent=5 // pred_check_branch
      %192 = sbr.rel (%p189) target = $region40
    $region39: #{_resnet_forward_impl.1} parent=5 // pred_region
      %s193 = ssub.s32 %s11, 1
      %s194 = smul.u32 16, %s16
      %p195 = scmp.lt.s32.totalorder %s194, 31
      %s196 = scalar_select %p195, %s194, 31
      %s197 = smul.addr %s196, 8
      %s198 = scalar_lea.vmem %s0, %s197
      %p199 = pneg %p37
      %p200 = pneg %p34
      %p201 = pneg %p58
      %p202 = pneg %p55
      %p203 = pneg %p79
      %p204 = pneg %p76
      %p205 = pneg %p100
      %p206 = pneg %p97
      %p207 = pneg %p121
      %p208 = pneg %p118
      %p209 = pneg %p147
      %p210 = pneg %p144
      %s211 = smul.u32 16, %s16
      %p212 = scmp.lt.s32.totalorder %s211, 31
      %s213 = scalar_select %p212, %s211, 31
      %s214 = smul.addr %s213, 8
      %s215 = scalar_lea.vmem %s5, %s214
      %s216 = smul.u32 16, %s16
      %p217 = scmp.lt.s32.totalorder %s216, 31
      %s218 = scalar_select %p217, %s216, 31
      %s219 = smul.addr %s218, 8
      %s220 = scalar_lea.vmem %s0, %s219
      %s221 = smul.u32 16, %s16
      %s222 = smul.u32 16, %s16
      %p223 = scmp.lt.s32.totalorder %s222, 31
      %s224 = scalar_select %p223, %s222, 31
      %s225 = smul.addr %s224, 8
      %s226 = scalar_lea.vmem %s5, %s225
      %s227 = smul.u32 16, %s16
      %v229 = vld [vmem:[%s220] sm:$0xff]
      %v230 = vld [vmem:[%s220 + $0x8] sm:$0xff]
      %v231 = vld [vmem:[%s220 + $0x10] sm:$0xff]
      %v232 = vld [vmem:[%s220 + $0x18] sm:$0xff]
      %v233 = vld [vmem:[%s220 + $0x20] sm:$0xff]
      %v234 = vld [vmem:[%s220 + $0x28] sm:$0xff]
      %v235 = vld [vmem:[%s220 + $0x30] sm:$0xff]
      %v236 = vld [vmem:[%s220 + $0x38] sm:$0xff]
      %v237 = vld [vmem:[%s220 + $0x40] sm:$0xff]
      %v238 = vld [vmem:[%s220 + $0x48] sm:$0xff]
      %v239 = vld [vmem:[%s220 + $0x50] sm:$0xff]
      %v240 = vld [vmem:[%s220 + $0x58] sm:$0xff]
      %v241 = vld [vmem:[%s220 + $0x60] sm:$0xff]
      %v242 = vld [vmem:[%s220 + $0x68] sm:$0xff]
      %v243 = vld [vmem:[%s220 + $0x70] sm:$0xff]
      %v244 = vld [vmem:[%s220 + $0x78] sm:$0xff]
      %v245 = vpack.c.bf16 %v230, %v229
      %v246 = vpack.c.bf16 %v232, %v231
      %v247 = vpack.c.bf16 %v234, %v233
      %v248 = vpack.c.bf16 %v236, %v235
      %v249 = vpack.c.bf16 %v238, %v237
      %v250 = vpack.c.bf16 %v240, %v239
      %v251 = vpack.c.bf16 %v242, %v241
      %v252 = vpack.c.bf16 %v244, %v243
      %v253 = vld [vmem:[%s1] sm:$0xf]
      %v254 = vld [vmem:[%s1 + $0x4] sm:$0xf]
      %v255 = vld [vmem:[%s1 + $0x8] sm:$0xf]
      %v256 = vld [vmem:[%s1 + $0xc] sm:$0xf]
      %v257 = vld [vmem:[%s1 + $0x10] sm:$0xf]
      %v258 = vld [vmem:[%s1 + $0x14] sm:$0xf]
      %v259 = vld [vmem:[%s1 + $0x18] sm:$0xf]
      %v260 = vld [vmem:[%s1 + $0x1c] sm:$0xf]
      %v269 = vunpack.c.l.b16 %v253
      %v270 = vunpack.c.l.b16 %v254
      %v271 = vunpack.c.l.b16 %v255
      %v272 = vunpack.c.l.b16 %v256
      %v273 = vunpack.c.l.b16 %v257
      %v274 = vunpack.c.l.b16 %v258
      %v275 = vunpack.c.l.b16 %v259
      %v276 = vunpack.c.l.b16 %v260
      %v277 = vpack.c.b16 %v270, %v269
      %v278 = vpack.c.b16 %v272, %v271
      %v279 = vpack.c.b16 %v274, %v273
      %v280 = vpack.c.b16 %v276, %v275
      %vm285 = vcmask 523264
      %v287 = vsel %vm285, %v245, 0
      %v290 = vsel %vm285, %v246, 0
      %v293 = vsel %vm285, %v247, 0
      %v296 = vsel %vm285, %v248, 0
      %v299 = vsel %vm285, %v249, 0
      %v302 = vsel %vm285, %v250, 0
      %v305 = vsel %vm285, %v251, 0
      %v308 = vsel %vm285, %v252, 0
      %310 = vmatprep.subr.bf16.mxu0 0
      %311 = vmatpush1.bf16.msra.mxu0 0
      %312 = vmatprep.subr.bf16.mxu0 0
      %313 = vmatpush1.bf16.msra.mxu0 0
      %314 = vmatprep.subr.bf16.mxu0 0
      %315 = vmatpush1.bf16.msra.mxu0 0
      %316 = vmatprep.subr.bf16.mxu0 0
      %317 = vmatpush1.bf16.msra.mxu0 0
      %318 = vmatprep.subr.bf16.mxu0 0
      %319 = vmatpush1.bf16.msra.mxu0 %v280
      %320 = vmatprep.subr.bf16.mxu0 0
      %321 = vmatpush1.bf16.msra.mxu0 %v279
      %322 = vmatprep.subr.bf16.mxu0 0
      %323 = vmatpush1.bf16.msra.mxu0 %v278
      %324 = vmatprep.subr.bf16.mxu0 0
      %325 = vmatpush1.bf16.msra.mxu0 %v277
      %326 = vmatprep.subr.bf16.mxu0 0
      %327 = vmatpush2.bf16.msra.mxu0 0
      %328 = vmatprep.subr.bf16.mxu0 0
      %329 = vmatpush2.bf16.msra.mxu0 0
      %330 = vmatprep.subr.bf16.mxu0 0
      %331 = vmatpush2.bf16.msra.mxu0 0
      %332 = vmatprep.subr.bf16.mxu0 0
      %333 = vmatpush2.bf16.msra.mxu0 0
      %334 = vmatprep.subr.bf16.mxu0 0
      %335 = vmatpush2.bf16.msra.mxu0 0
      %336 = vmatprep.subr.bf16.mxu0 0
      %337 = vmatpush2.bf16.msra.mxu0 0
      %338 = vmatprep.subr.bf16.mxu0 0
      %339 = vmatpush2.bf16.msra.mxu0 0
      %340 = vmatprep.subr.bf16.mxu0 0
      %341 = vmatpush2.bf16.msra.mxu0 0
      %342 = vmatprep.mubr.bf16.mxu0 0
      %343 = vmatmul.mubr.bf16.gmra.mxu0 %v287
      %v344 = vpop.f32.mrf.mxu0
      %v345 = vadd.f32 0.0, %v344
      %v346 = vpop.f32.mrf.mxu0
      %v347 = vpop.f32.mrf.mxu0
      %v348 = vadd.f32 0.0, %v347
      %v349 = vpop.f32.mrf.mxu0
      %350 = vmatprep.mubr.bf16.mxu0 0
      %351 = vmatmul.mubr.bf16.gmra.mxu0 %v290
      %v352 = vpop.f32.mrf.mxu0
      %v353 = vadd.f32 0.0, %v352
      %v354 = vpop.f32.mrf.mxu0
      %v355 = vpop.f32.mrf.mxu0
      %v356 = vadd.f32 0.0, %v355
      %v357 = vpop.f32.mrf.mxu0
      %358 = vmatprep.mubr.bf16.mxu0 0
      %359 = vmatmul.mubr.bf16.gmra.mxu0 %v293
      %v360 = vpop.f32.mrf.mxu0
      %v361 = vadd.f32 0.0, %v360
      %v362 = vpop.f32.mrf.mxu0
      %v363 = vpop.f32.mrf.mxu0
      %v364 = vadd.f32 0.0, %v363
      %v365 = vpop.f32.mrf.mxu0
      %366 = vmatprep.mubr.bf16.mxu0 0
      %367 = vmatmul.mubr.bf16.gmra.mxu0 %v296
      %v368 = vpop.f32.mrf.mxu0
      %v369 = vadd.f32 0.0, %v368
      %v370 = vpop.f32.mrf.mxu0
      %v371 = vpop.f32.mrf.mxu0
      %v372 = vadd.f32 0.0, %v371
      %v373 = vpop.f32.mrf.mxu0
      %374 = vmatprep.mubr.bf16.mxu0 0
      %375 = vmatmul.mubr.bf16.gmra.mxu0 %v299
      %v376 = vpop.f32.mrf.mxu0
      %v377 = vadd.f32 0.0, %v376
      %v378 = vpop.f32.mrf.mxu0
      %v379 = vpop.f32.mrf.mxu0
      %v380 = vadd.f32 0.0, %v379
      %v381 = vpop.f32.mrf.mxu0
      %382 = vmatprep.mubr.bf16.mxu0 0
      %383 = vmatmul.mubr.bf16.gmra.mxu0 %v302
      %v384 = vpop.f32.mrf.mxu0
      %v385 = vadd.f32 0.0, %v384
      %v386 = vpop.f32.mrf.mxu0
      %v387 = vpop.f32.mrf.mxu0
      %v388 = vadd.f32 0.0, %v387
      %v389 = vpop.f32.mrf.mxu0
      %390 = vmatprep.mubr.bf16.mxu0 0
      %391 = vmatmul.mubr.bf16.gmra.mxu0 %v305
      %v392 = vpop.f32.mrf.mxu0
      %v393 = vadd.f32 0.0, %v392
      %v394 = vpop.f32.mrf.mxu0
      %v395 = vpop.f32.mrf.mxu0
      %v396 = vadd.f32 0.0, %v395
      %v397 = vpop.f32.mrf.mxu0
      %398 = vmatprep.mubr.bf16.mxu0 0
      %399 = vmatmul.mubr.bf16.gmra.mxu0 %v308
      %v400 = vpop.f32.mrf.mxu0
      %v401 = vadd.f32 0.0, %v400
      %v402 = vpop.f32.mrf.mxu0
      %v403 = vpop.f32.mrf.mxu0
      %v404 = vadd.f32 0.0, %v403
      %v405 = vpop.f32.mrf.mxu0
      %406 = vdwg.mxu0
      %v407 = vpack.c.bf16 %v348, %v345
      %v408 = vpack.c.bf16 %v356, %v353
      %v409 = vpack.c.bf16 %v364, %v361
      %v410 = vpack.c.bf16 %v372, %v369
      %v411 = vpack.c.bf16 %v380, %v377
      %v412 = vpack.c.bf16 %v388, %v385
      %v413 = vpack.c.bf16 %v396, %v393
      %v414 = vpack.c.bf16 %v404, %v401
      %v415 = vld [vmem:[%s2] sm:$0x1]
      %v416 = vpack.c.bf16 %v415, %v415
      %v418 = vpack.i.b16 %v416, %v416
      %v420 = vlaneseq
      %v421 = vshrl.u32 %v420, 7
      %v422 = vsub.s32 0, %v421
      %v423 = vrot.slane %v418, %v422
      %v424 = vadd.bf16 %v407, %v423
      %v425 = vadd.bf16 %v408, %v423
      %v426 = vadd.bf16 %v409, %v423
      %v427 = vadd.bf16 %v410, %v423
      %v428 = vadd.bf16 %v411, %v423
      %v429 = vadd.bf16 %v412, %v423
      %v430 = vadd.bf16 %v413, %v423
      %v431 = vadd.bf16 %v414, %v423
      %v432 = vmax.bf16 %v424, 0
      %v433 = vmax.bf16 %v425, 0
      %v434 = vmax.bf16 %v426, 0
      %v435 = vmax.bf16 %v427, 0
      %v436 = vmax.bf16 %v428, 0
      %v437 = vmax.bf16 %v429, 0
      %v438 = vmax.bf16 %v430, 0
      %v439 = vmax.bf16 %v431, 0
      %s440 = scalar_lea.vmem %s1, 32
      %v441 = vld [vmem:[%s440] sm:$0xf]
      %v442 = vld [vmem:[%s440 + $0x4] sm:$0xf]
      %v443 = vld [vmem:[%s440 + $0x8] sm:$0xf]
      %v444 = vld [vmem:[%s440 + $0xc] sm:$0xf]
      %v445 = vld [vmem:[%s440 + $0x10] sm:$0xf]
      %v446 = vld [vmem:[%s440 + $0x14] sm:$0xf]
      %v447 = vld [vmem:[%s440 + $0x18] sm:$0xf]
      %v448 = vld [vmem:[%s440 + $0x1c] sm:$0xf]
      %v457 = vunpack.c.l.b16 %v441
      %v458 = vunpack.c.l.b16 %v442
      %v459 = vunpack.c.l.b16 %v443
      %v460 = vunpack.c.l.b16 %v444
      %v461 = vunpack.c.l.b16 %v445
      %v462 = vunpack.c.l.b16 %v446
      %v463 = vunpack.c.l.b16 %v447
      %v464 = vunpack.c.l.b16 %v448
      %v465 = vpack.c.b16 %v458, %v457
      %v466 = vpack.c.b16 %v460, %v459
      %v467 = vpack.c.b16 %v462, %v461
      %v468 = vpack.c.b16 %v464, %v463
      %v474 = vsel %vm285, %v432, 0
      %v477 = vsel %vm285, %v433, 0
      %v480 = vsel %vm285, %v434, 0
      %v483 = vsel %vm285, %v435, 0
      %v486 = vsel %vm285, %v436, 0
      %v489 = vsel %vm285, %v437, 0
      %v492 = vsel %vm285, %v438, 0
      %v495 = vsel %vm285, %v439, 0
      %497 = vmatprep.subr.bf16.mxu0 0
      %498 = vmatpush1.bf16.msra.mxu0 0
      %499 = vmatprep.subr.bf16.mxu0 0
      %500 = vmatpush1.bf16.msra.mxu0 0
      %501 = vmatprep.subr.bf16.mxu0 0
      %502 = vmatpush1.bf16.msra.mxu0 0
      %503 = vmatprep.subr.bf16.mxu0 0
      %504 = vmatpush1.bf16.msra.mxu0 0
      %505 = vmatprep.subr.bf16.mxu0 0
      %506 = vmatpush1.bf16.msra.mxu0 %v468
      %507 = vmatprep.subr.bf16.mxu0 0
      %508 = vmatpush1.bf16.msra.mxu0 %v467
      %509 = vmatprep.subr.bf16.mxu0 0
      %510 = vmatpush1.bf16.msra.mxu0 %v466
      %511 = vmatprep.subr.bf16.mxu0 0
      %512 = vmatpush1.bf16.msra.mxu0 %v465
      %513 = vmatprep.subr.bf16.mxu0 0
      %514 = vmatpush2.bf16.msra.mxu0 0
      %515 = vmatprep.subr.bf16.mxu0 0
      %516 = vmatpush2.bf16.msra.mxu0 0
      %517 = vmatprep.subr.bf16.mxu0 0
      %518 = vmatpush2.bf16.msra.mxu0 0
      %519 = vmatprep.subr.bf16.mxu0 0
      %520 = vmatpush2.bf16.msra.mxu0 0
      %521 = vmatprep.subr.bf16.mxu0 0
      %522 = vmatpush2.bf16.msra.mxu0 0
      %523 = vmatprep.subr.bf16.mxu0 0
      %524 = vmatpush2.bf16.msra.mxu0 0
      %525 = vmatprep.subr.bf16.mxu0 0
      %526 = vmatpush2.bf16.msra.mxu0 0
      %527 = vmatprep.subr.bf16.mxu0 0
      %528 = vmatpush2.bf16.msra.mxu0 0
      %529 = vmatprep.mubr.bf16.mxu0 0
      %530 = vmatmul.mubr.bf16.gmra.mxu0 %v474
      %v531 = vpop.f32.mrf.mxu0
      %v532 = vadd.f32 0.0, %v531
      %v533 = vpop.f32.mrf.mxu0
      %v534 = vpop.f32.mrf.mxu0
      %v535 = vadd.f32 0.0, %v534
      %v536 = vpop.f32.mrf.mxu0
      %537 = vmatprep.mubr.bf16.mxu0 0
      %538 = vmatmul.mubr.bf16.gmra.mxu0 %v477
      %v539 = vpop.f32.mrf.mxu0
      %v540 = vadd.f32 0.0, %v539
      %v541 = vpop.f32.mrf.mxu0
      %v542 = vpop.f32.mrf.mxu0
      %v543 = vadd.f32 0.0, %v542
      %v544 = vpop.f32.mrf.mxu0
      %545 = vmatprep.mubr.bf16.mxu0 0
      %546 = vmatmul.mubr.bf16.gmra.mxu0 %v480
      %v547 = vpop.f32.mrf.mxu0
      %v548 = vadd.f32 0.0, %v547
      %v549 = vpop.f32.mrf.mxu0
      %v550 = vpop.f32.mrf.mxu0
      %v551 = vadd.f32 0.0, %v550
      %v552 = vpop.f32.mrf.mxu0
      %553 = vmatprep.mubr.bf16.mxu0 0
      %554 = vmatmul.mubr.bf16.gmra.mxu0 %v483
      %v555 = vpop.f32.mrf.mxu0
      %v556 = vadd.f32 0.0, %v555
      %v557 = vpop.f32.mrf.mxu0
      %v558 = vpop.f32.mrf.mxu0
      %v559 = vadd.f32 0.0, %v558
      %v560 = vpop.f32.mrf.mxu0
      %561 = vmatprep.mubr.bf16.mxu0 0
      %562 = vmatmul.mubr.bf16.gmra.mxu0 %v486
      %v563 = vpop.f32.mrf.mxu0
      %v564 = vadd.f32 0.0, %v563
      %v565 = vpop.f32.mrf.mxu0
      %v566 = vpop.f32.mrf.mxu0
      %v567 = vadd.f32 0.0, %v566
      %v568 = vpop.f32.mrf.mxu0
      %569 = vmatprep.mubr.bf16.mxu0 0
      %570 = vmatmul.mubr.bf16.gmra.mxu0 %v489
      %v571 = vpop.f32.mrf.mxu0
      %v572 = vadd.f32 0.0, %v571
      %v573 = vpop.f32.mrf.mxu0
      %v574 = vpop.f32.mrf.mxu0
      %v575 = vadd.f32 0.0, %v574
      %v576 = vpop.f32.mrf.mxu0
      %577 = vmatprep.mubr.bf16.mxu0 0
      %578 = vmatmul.mubr.bf16.gmra.mxu0 %v492
      %v579 = vpop.f32.mrf.mxu0
      %v580 = vadd.f32 0.0, %v579
      %v581 = vpop.f32.mrf.mxu0
      %v582 = vpop.f32.mrf.mxu0
      %v583 = vadd.f32 0.0, %v582
      %v584 = vpop.f32.mrf.mxu0
      %585 = vmatprep.mubr.bf16.mxu0 0
      %586 = vmatmul.mubr.bf16.gmra.mxu0 %v495
      %v587 = vpop.f32.mrf.mxu0
      %v588 = vadd.f32 0.0, %v587
      %v589 = vpop.f32.mrf.mxu0
      %v590 = vpop.f32.mrf.mxu0
      %v591 = vadd.f32 0.0, %v590
      %v592 = vpop.f32.mrf.mxu0
      %593 = vdwg.mxu0
      %v594 = vpack.c.bf16 %v535, %v532
      %v595 = vpack.c.bf16 %v543, %v540
      %v596 = vpack.c.bf16 %v551, %v548
      %v597 = vpack.c.bf16 %v559, %v556
      %v598 = vpack.c.bf16 %v567, %v564
      %v599 = vpack.c.bf16 %v575, %v572
      %v600 = vpack.c.bf16 %v583, %v580
      %v601 = vpack.c.bf16 %v591, %v588
      %v602 = vld [vmem:[%s2 + $0x1] sm:$0x1]
      %v603 = vpack.c.bf16 %v602, %v602
      %v605 = vpack.i.b16 %v603, %v603
      %v607 = vlaneseq
      %v608 = vshrl.u32 %v607, 7
      %v609 = vsub.s32 0, %v608
      %v610 = vrot.slane %v605, %v609
      %v611 = vadd.bf16 %v594, %v610
      %v612 = vadd.bf16 %v595, %v610
      %v613 = vadd.bf16 %v596, %v610
      %v614 = vadd.bf16 %v597, %v610
      %v615 = vadd.bf16 %v598, %v610
      %v616 = vadd.bf16 %v599, %v610
      %v617 = vadd.bf16 %v600, %v610
      %v618 = vadd.bf16 %v601, %v610
      %v619 = vadd.bf16 %v611, %v245
      %v620 = vadd.bf16 %v612, %v246
      %v621 = vadd.bf16 %v613, %v247
      %v622 = vadd.bf16 %v614, %v248
      %v623 = vadd.bf16 %v615, %v249
      %v624 = vadd.bf16 %v616, %v250
      %v625 = vadd.bf16 %v617, %v251
      %v626 = vadd.bf16 %v618, %v252
      %v627 = vmax.bf16 %v619, 0
      %v628 = vmax.bf16 %v620, 0
      %v629 = vmax.bf16 %v621, 0
      %v630 = vmax.bf16 %v622, 0
      %v631 = vmax.bf16 %v623, 0
      %v632 = vmax.bf16 %v624, 0
      %v633 = vmax.bf16 %v625, 0
      %v634 = vmax.bf16 %v626, 0
      %s635 = scalar_lea.vmem %s1, 64
      %v636 = vld [vmem:[%s635] sm:$0xf]
      %v637 = vld [vmem:[%s635 + $0x4] sm:$0xf]
      %v638 = vld [vmem:[%s635 + $0x8] sm:$0xf]
      %v639 = vld [vmem:[%s635 + $0xc] sm:$0xf]
      %v640 = vld [vmem:[%s635 + $0x10] sm:$0xf]
      %v641 = vld [vmem:[%s635 + $0x14] sm:$0xf]
      %v642 = vld [vmem:[%s635 + $0x18] sm:$0xf]
      %v643 = vld [vmem:[%s635 + $0x1c] sm:$0xf]
      %v652 = vunpack.c.l.b16 %v636
      %v653 = vunpack.c.l.b16 %v637
      %v654 = vunpack.c.l.b16 %v638
      %v655 = vunpack.c.l.b16 %v639
      %v656 = vunpack.c.l.b16 %v640
      %v657 = vunpack.c.l.b16 %v641
      %v658 = vunpack.c.l.b16 %v642
      %v659 = vunpack.c.l.b16 %v643
      %v660 = vpack.c.b16 %v653, %v652
      %v661 = vpack.c.b16 %v655, %v654
      %v662 = vpack.c.b16 %v657, %v656
      %v663 = vpack.c.b16 %v659, %v658
      %v669 = vsel %vm285, %v627, 0
      %v672 = vsel %vm285, %v628, 0
      %v675 = vsel %vm285, %v629, 0
      %v678 = vsel %vm285, %v630, 0
      %v681 = vsel %vm285, %v631, 0
      %v684 = vsel %vm285, %v632, 0
      %v687 = vsel %vm285, %v633, 0
      %v690 = vsel %vm285, %v634, 0
      %692 = vmatprep.subr.bf16.mxu0 0
      %693 = vmatpush1.bf16.msra.mxu0 0
      %694 = vmatprep.subr.bf16.mxu0 0
      %695 = vmatpush1.bf16.msra.mxu0 0
      %696 = vmatprep.subr.bf16.mxu0 0
      %697 = vmatpush1.bf16.msra.mxu0 0
      %698 = vmatprep.subr.bf16.mxu0 0
      %699 = vmatpush1.bf16.msra.mxu0 0
      %700 = vmatprep.subr.bf16.mxu0 0
      %701 = vmatpush1.bf16.msra.mxu0 %v663
      %702 = vmatprep.subr.bf16.mxu0 0
      %703 = vmatpush1.bf16.msra.mxu0 %v662
      %704 = vmatprep.subr.bf16.mxu0 0
      %705 = vmatpush1.bf16.msra.mxu0 %v661
      %706 = vmatprep.subr.bf16.mxu0 0
      %707 = vmatpush1.bf16.msra.mxu0 %v660
      %708 = vmatprep.subr.bf16.mxu0 0
      %709 = vmatpush2.bf16.msra.mxu0 0
      %710 = vmatprep.subr.bf16.mxu0 0
      %711 = vmatpush2.bf16.msra.mxu0 0
      %712 = vmatprep.subr.bf16.mxu0 0
      %713 = vmatpush2.bf16.msra.mxu0 0
      %714 = vmatprep.subr.bf16.mxu0 0
      %715 = vmatpush2.bf16.msra.mxu0 0
      %716 = vmatprep.subr.bf16.mxu0 0
      %717 = vmatpush2.bf16.msra.mxu0 0
      %718 = vmatprep.subr.bf16.mxu0 0
      %719 = vmatpush2.bf16.msra.mxu0 0
      %720 = vmatprep.subr.bf16.mxu0 0
      %721 = vmatpush2.bf16.msra.mxu0 0
      %722 = vmatprep.subr.bf16.mxu0 0
      %723 = vmatpush2.bf16.msra.mxu0 0
      %724 = vmatprep.mubr.bf16.mxu0 0
      %725 = vmatmul.mubr.bf16.gmra.mxu0 %v669
      %v726 = vpop.f32.mrf.mxu0
      %v727 = vadd.f32 0.0, %v726
      %v728 = vpop.f32.mrf.mxu0
      %v729 = vpop.f32.mrf.mxu0
      %v730 = vadd.f32 0.0, %v729
      %v731 = vpop.f32.mrf.mxu0
      %732 = vmatprep.mubr.bf16.mxu0 0
      %733 = vmatmul.mubr.bf16.gmra.mxu0 %v672
      %v734 = vpop.f32.mrf.mxu0
      %v735 = vadd.f32 0.0, %v734
      %v736 = vpop.f32.mrf.mxu0
      %v737 = vpop.f32.mrf.mxu0
      %v738 = vadd.f32 0.0, %v737
      %v739 = vpop.f32.mrf.mxu0
      %740 = vmatprep.mubr.bf16.mxu0 0
      %741 = vmatmul.mubr.bf16.gmra.mxu0 %v675
      %v742 = vpop.f32.mrf.mxu0
      %v743 = vadd.f32 0.0, %v742
      %v744 = vpop.f32.mrf.mxu0
      %v745 = vpop.f32.mrf.mxu0
      %v746 = vadd.f32 0.0, %v745
      %v747 = vpop.f32.mrf.mxu0
      %748 = vmatprep.mubr.bf16.mxu0 0
      %749 = vmatmul.mubr.bf16.gmra.mxu0 %v678
      %v750 = vpop.f32.mrf.mxu0
      %v751 = vadd.f32 0.0, %v750
      %v752 = vpop.f32.mrf.mxu0
      %v753 = vpop.f32.mrf.mxu0
      %v754 = vadd.f32 0.0, %v753
      %v755 = vpop.f32.mrf.mxu0
      %756 = vmatprep.mubr.bf16.mxu0 0
      %757 = vmatmul.mubr.bf16.gmra.mxu0 %v681
      %v758 = vpop.f32.mrf.mxu0
      %v759 = vadd.f32 0.0, %v758
      %v760 = vpop.f32.mrf.mxu0
      %v761 = vpop.f32.mrf.mxu0
      %v762 = vadd.f32 0.0, %v761
      %v763 = vpop.f32.mrf.mxu0
      %764 = vmatprep.mubr.bf16.mxu0 0
      %765 = vmatmul.mubr.bf16.gmra.mxu0 %v684
      %v766 = vpop.f32.mrf.mxu0
      %v767 = vadd.f32 0.0, %v766
      %v768 = vpop.f32.mrf.mxu0
      %v769 = vpop.f32.mrf.mxu0
      %v770 = vadd.f32 0.0, %v769
      %v771 = vpop.f32.mrf.mxu0
      %772 = vmatprep.mubr.bf16.mxu0 0
      %773 = vmatmul.mubr.bf16.gmra.mxu0 %v687
      %v774 = vpop.f32.mrf.mxu0
      %v775 = vadd.f32 0.0, %v774
      %v776 = vpop.f32.mrf.mxu0
      %v777 = vpop.f32.mrf.mxu0
      %v778 = vadd.f32 0.0, %v777
      %v779 = vpop.f32.mrf.mxu0
      %780 = vmatprep.mubr.bf16.mxu0 0
      %781 = vmatmul.mubr.bf16.gmra.mxu0 %v690
      %v782 = vpop.f32.mrf.mxu0
      %v783 = vadd.f32 0.0, %v782
      %v784 = vpop.f32.mrf.mxu0
      %v785 = vpop.f32.mrf.mxu0
      %v786 = vadd.f32 0.0, %v785
      %v787 = vpop.f32.mrf.mxu0
      %788 = vdwg.mxu0
      %v789 = vpack.c.bf16 %v730, %v727
      %v790 = vpack.c.bf16 %v738, %v735
      %v791 = vpack.c.bf16 %v746, %v743
      %v792 = vpack.c.bf16 %v754, %v751
      %v793 = vpack.c.bf16 %v762, %v759
      %v794 = vpack.c.bf16 %v770, %v767
      %v795 = vpack.c.bf16 %v778, %v775
      %v796 = vpack.c.bf16 %v786, %v783
      %v797 = vld [vmem:[%s2 + $0x2] sm:$0x1]
      %v798 = vpack.c.bf16 %v797, %v797
      %v800 = vpack.i.b16 %v798, %v798
      %v802 = vlaneseq
      %v803 = vshrl.u32 %v802, 7
      %v804 = vsub.s32 0, %v803
      %v805 = vrot.slane %v800, %v804
      %v806 = vadd.bf16 %v789, %v805
      %v807 = vadd.bf16 %v790, %v805
      %v808 = vadd.bf16 %v791, %v805
      %v809 = vadd.bf16 %v792, %v805
      %v810 = vadd.bf16 %v793, %v805
      %v811 = vadd.bf16 %v794, %v805
      %v812 = vadd.bf16 %v795, %v805
      %v813 = vadd.bf16 %v796, %v805
      %v814 = vmax.bf16 %v806, 0
      %v815 = vmax.bf16 %v807, 0
      %v816 = vmax.bf16 %v808, 0
      %v817 = vmax.bf16 %v809, 0
      %v818 = vmax.bf16 %v810, 0
      %v819 = vmax.bf16 %v811, 0
      %v820 = vmax.bf16 %v812, 0
      %v821 = vmax.bf16 %v813, 0
      %s822 = scalar_lea.vmem %s1, 96
      %v823 = vld [vmem:[%s822] sm:$0xf]
      %v824 = vld [vmem:[%s822 + $0x4] sm:$0xf]
      %v825 = vld [vmem:[%s822 + $0x8] sm:$0xf]
      %v826 = vld [vmem:[%s822 + $0xc] sm:$0xf]
      %v827 = vld [vmem:[%s822 + $0x10] sm:$0xf]
      %v828 = vld [vmem:[%s822 + $0x14] sm:$0xf]
      %v829 = vld [vmem:[%s822 + $0x18] sm:$0xf]
      %v830 = vld [vmem:[%s822 + $0x1c] sm:$0xf]
      %v839 = vunpack.c.l.b16 %v823
      %v840 = vunpack.c.l.b16 %v824
      %v841 = vunpack.c.l.b16 %v825
      %v842 = vunpack.c.l.b16 %v826
      %v843 = vunpack.c.l.b16 %v827
      %v844 = vunpack.c.l.b16 %v828
      %v845 = vunpack.c.l.b16 %v829
      %v846 = vunpack.c.l.b16 %v830
      %v847 = vpack.c.b16 %v840, %v839
      %v848 = vpack.c.b16 %v842, %v841
      %v849 = vpack.c.b16 %v844, %v843
      %v850 = vpack.c.b16 %v846, %v845
      %v856 = vsel %vm285, %v814, 0
      %v859 = vsel %vm285, %v815, 0
      %v862 = vsel %vm285, %v816, 0
      %v865 = vsel %vm285, %v817, 0
      %v868 = vsel %vm285, %v818, 0
      %v871 = vsel %vm285, %v819, 0
      %v874 = vsel %vm285, %v820, 0
      %v877 = vsel %vm285, %v821, 0
      %879 = vmatprep.subr.bf16.mxu0 0
      %880 = vmatpush1.bf16.msra.mxu0 0
      %881 = vmatprep.subr.bf16.mxu0 0
      %882 = vmatpush1.bf16.msra.mxu0 0
      %883 = vmatprep.subr.bf16.mxu0 0
      %884 = vmatpush1.bf16.msra.mxu0 0
      %885 = vmatprep.subr.bf16.mxu0 0
      %886 = vmatpush1.bf16.msra.mxu0 0
      %887 = vmatprep.subr.bf16.mxu0 0
      %888 = vmatpush1.bf16.msra.mxu0 %v850
      %889 = vmatprep.subr.bf16.mxu0 0
      %890 = vmatpush1.bf16.msra.mxu0 %v849
      %891 = vmatprep.subr.bf16.mxu0 0
      %892 = vmatpush1.bf16.msra.mxu0 %v848
      %893 = vmatprep.subr.bf16.mxu0 0
      %894 = vmatpush1.bf16.msra.mxu0 %v847
      %895 = vmatprep.subr.bf16.mxu0 0
      %896 = vmatpush2.bf16.msra.mxu0 0
      %897 = vmatprep.subr.bf16.mxu0 0
      %898 = vmatpush2.bf16.msra.mxu0 0
      %899 = vmatprep.subr.bf16.mxu0 0
      %900 = vmatpush2.bf16.msra.mxu0 0
      %901 = vmatprep.subr.bf16.mxu0 0
      %902 = vmatpush2.bf16.msra.mxu0 0
      %903 = vmatprep.subr.bf16.mxu0 0
      %904 = vmatpush2.bf16.msra.mxu0 0
      %905 = vmatprep.subr.bf16.mxu0 0
      %906 = vmatpush2.bf16.msra.mxu0 0
      %907 = vmatprep.subr.bf16.mxu0 0
      %908 = vmatpush2.bf16.msra.mxu0 0
      %909 = vmatprep.subr.bf16.mxu0 0
      %910 = vmatpush2.bf16.msra.mxu0 0
      %911 = vmatprep.mubr.bf16.mxu0 0
      %912 = vmatmul.mubr.bf16.gmra.mxu0 %v856
      %v913 = vpop.f32.mrf.mxu0
      %v914 = vadd.f32 0.0, %v913
      %v915 = vpop.f32.mrf.mxu0
      %v916 = vpop.f32.mrf.mxu0
      %v917 = vadd.f32 0.0, %v916
      %v918 = vpop.f32.mrf.mxu0
      %919 = vmatprep.mubr.bf16.mxu0 0
      %920 = vmatmul.mubr.bf16.gmra.mxu0 %v859
      %v921 = vpop.f32.mrf.mxu0
      %v922 = vadd.f32 0.0, %v921
      %v923 = vpop.f32.mrf.mxu0
      %v924 = vpop.f32.mrf.mxu0
      %v925 = vadd.f32 0.0, %v924
      %v926 = vpop.f32.mrf.mxu0
      %927 = vmatprep.mubr.bf16.mxu0 0
      %928 = vmatmul.mubr.bf16.gmra.mxu0 %v862
      %v929 = vpop.f32.mrf.mxu0
      %v930 = vadd.f32 0.0, %v929
      %v931 = vpop.f32.mrf.mxu0
      %v932 = vpop.f32.mrf.mxu0
      %v933 = vadd.f32 0.0, %v932
      %v934 = vpop.f32.mrf.mxu0
      %935 = vmatprep.mubr.bf16.mxu0 0
      %936 = vmatmul.mubr.bf16.gmra.mxu0 %v865
      %v937 = vpop.f32.mrf.mxu0
      %v938 = vadd.f32 0.0, %v937
      %v939 = vpop.f32.mrf.mxu0
      %v940 = vpop.f32.mrf.mxu0
      %v941 = vadd.f32 0.0, %v940
      %v942 = vpop.f32.mrf.mxu0
      %943 = vmatprep.mubr.bf16.mxu0 0
      %944 = vmatmul.mubr.bf16.gmra.mxu0 %v868
      %v945 = vpop.f32.mrf.mxu0
      %v946 = vadd.f32 0.0, %v945
      %v947 = vpop.f32.mrf.mxu0
      %v948 = vpop.f32.mrf.mxu0
      %v949 = vadd.f32 0.0, %v948
      %v950 = vpop.f32.mrf.mxu0
      %951 = vmatprep.mubr.bf16.mxu0 0
      %952 = vmatmul.mubr.bf16.gmra.mxu0 %v871
      %v953 = vpop.f32.mrf.mxu0
      %v954 = vadd.f32 0.0, %v953
      %v955 = vpop.f32.mrf.mxu0
      %v956 = vpop.f32.mrf.mxu0
      %v957 = vadd.f32 0.0, %v956
      %v958 = vpop.f32.mrf.mxu0
      %959 = vmatprep.mubr.bf16.mxu0 0
      %960 = vmatmul.mubr.bf16.gmra.mxu0 %v874
      %v961 = vpop.f32.mrf.mxu0
      %v962 = vadd.f32 0.0, %v961
      %v963 = vpop.f32.mrf.mxu0
      %v964 = vpop.f32.mrf.mxu0
      %v965 = vadd.f32 0.0, %v964
      %v966 = vpop.f32.mrf.mxu0
      %967 = vmatprep.mubr.bf16.mxu0 0
      %968 = vmatmul.mubr.bf16.gmra.mxu0 %v877
      %v969 = vpop.f32.mrf.mxu0
      %v970 = vadd.f32 0.0, %v969
      %v971 = vpop.f32.mrf.mxu0
      %v972 = vpop.f32.mrf.mxu0
      %v973 = vadd.f32 0.0, %v972
      %v974 = vpop.f32.mrf.mxu0
      %975 = vdwg.mxu0
      %v976 = vpack.c.bf16 %v917, %v914
      %v977 = vpack.c.bf16 %v925, %v922
      %v978 = vpack.c.bf16 %v933, %v930
      %v979 = vpack.c.bf16 %v941, %v938
      %v980 = vpack.c.bf16 %v949, %v946
      %v981 = vpack.c.bf16 %v957, %v954
      %v982 = vpack.c.bf16 %v965, %v962
      %v983 = vpack.c.bf16 %v973, %v970
      %v984 = vld [vmem:[%s2 + $0x3] sm:$0x1]
      %v985 = vpack.c.bf16 %v984, %v984
      %v987 = vpack.i.b16 %v985, %v985
      %v989 = vlaneseq
      %v990 = vshrl.u32 %v989, 7
      %v991 = vsub.s32 0, %v990
      %v992 = vrot.slane %v987, %v991
      %v993 = vadd.bf16 %v976, %v992
      %v994 = vadd.bf16 %v977, %v992
      %v995 = vadd.bf16 %v978, %v992
      %v996 = vadd.bf16 %v979, %v992
      %v997 = vadd.bf16 %v980, %v992
      %v998 = vadd.bf16 %v981, %v992
      %v999 = vadd.bf16 %v982, %v992
      %v1000 = vadd.bf16 %v983, %v992
      %v1001 = vadd.bf16 %v993, %v627
      %v1002 = vadd.bf16 %v994, %v628
      %v1003 = vadd.bf16 %v995, %v629
      %v1004 = vadd.bf16 %v996, %v630
      %v1005 = vadd.bf16 %v997, %v631
      %v1006 = vadd.bf16 %v998, %v632
      %v1007 = vadd.bf16 %v999, %v633
      %v1008 = vadd.bf16 %v1000, %v634
      %v1009 = vmax.bf16 %v1001, 0
      %v1010 = vmax.bf16 %v1002, 0
      %v1011 = vmax.bf16 %v1003, 0
      %v1012 = vmax.bf16 %v1004, 0
      %v1013 = vmax.bf16 %v1005, 0
      %v1014 = vmax.bf16 %v1006, 0
      %v1015 = vmax.bf16 %v1007, 0
      %v1016 = vmax.bf16 %v1008, 0
      %s1017 = scalar_lea.vmem %s1, 128
      %v1018 = vld [vmem:[%s1017] sm:$0xf]
      %v1019 = vld [vmem:[%s1017 + $0x4] sm:$0xf]
      %v1020 = vld [vmem:[%s1017 + $0x8] sm:$0xf]
      %v1021 = vld [vmem:[%s1017 + $0xc] sm:$0xf]
      %v1022 = vld [vmem:[%s1017 + $0x10] sm:$0xf]
      %v1023 = vld [vmem:[%s1017 + $0x14] sm:$0xf]
      %v1024 = vld [vmem:[%s1017 + $0x18] sm:$0xf]
      %v1025 = vld [vmem:[%s1017 + $0x1c] sm:$0xf]
      %v1034 = vunpack.c.l.b16 %v1018
      %v1035 = vunpack.c.l.b16 %v1019
      %v1036 = vunpack.c.l.b16 %v1020
      %v1037 = vunpack.c.l.b16 %v1021
      %v1038 = vunpack.c.l.b16 %v1022
      %v1039 = vunpack.c.l.b16 %v1023
      %v1040 = vunpack.c.l.b16 %v1024
      %v1041 = vunpack.c.l.b16 %v1025
      %v1042 = vpack.c.b16 %v1035, %v1034
      %v1043 = vpack.c.b16 %v1037, %v1036
      %v1044 = vpack.c.b16 %v1039, %v1038
      %v1045 = vpack.c.b16 %v1041, %v1040
      %v1051 = vsel %vm285, %v1009, 0
      %v1054 = vsel %vm285, %v1010, 0
      %v1057 = vsel %vm285, %v1011, 0
      %v1060 = vsel %vm285, %v1012, 0
      %v1063 = vsel %vm285, %v1013, 0
      %v1066 = vsel %vm285, %v1014, 0
      %v1069 = vsel %vm285, %v1015, 0
      %v1072 = vsel %vm285, %v1016, 0
      %1074 = vmatprep.subr.bf16.mxu0 0
      %1075 = vmatpush1.bf16.msra.mxu0 0
      %1076 = vmatprep.subr.bf16.mxu0 0
      %1077 = vmatpush1.bf16.msra.mxu0 0
      %1078 = vmatprep.subr.bf16.mxu0 0
      %1079 = vmatpush1.bf16.msra.mxu0 0
      %1080 = vmatprep.subr.bf16.mxu0 0
      %1081 = vmatpush1.bf16.msra.mxu0 0
      %1082 = vmatprep.subr.bf16.mxu0 0
      %1083 = vmatpush1.bf16.msra.mxu0 %v1045
      %1084 = vmatprep.subr.bf16.mxu0 0
      %1085 = vmatpush1.bf16.msra.mxu0 %v1044
      %1086 = vmatprep.subr.bf16.mxu0 0
      %1087 = vmatpush1.bf16.msra.mxu0 %v1043
      %1088 = vmatprep.subr.bf16.mxu0 0
      %1089 = vmatpush1.bf16.msra.mxu0 %v1042
      %1090 = vmatprep.subr.bf16.mxu0 0
      %1091 = vmatpush2.bf16.msra.mxu0 0
      %1092 = vmatprep.subr.bf16.mxu0 0
      %1093 = vmatpush2.bf16.msra.mxu0 0
      %1094 = vmatprep.subr.bf16.mxu0 0
      %1095 = vmatpush2.bf16.msra.mxu0 0
      %1096 = vmatprep.subr.bf16.mxu0 0
      %1097 = vmatpush2.bf16.msra.mxu0 0
      %1098 = vmatprep.subr.bf16.mxu0 0
      %1099 = vmatpush2.bf16.msra.mxu0 0
      %1100 = vmatprep.subr.bf16.mxu0 0
      %1101 = vmatpush2.bf16.msra.mxu0 0
      %1102 = vmatprep.subr.bf16.mxu0 0
      %1103 = vmatpush2.bf16.msra.mxu0 0
      %1104 = vmatprep.subr.bf16.mxu0 0
      %1105 = vmatpush2.bf16.msra.mxu0 0
      %1106 = vmatprep.mubr.bf16.mxu0 0
      %1107 = vmatmul.mubr.bf16.gmra.mxu0 %v1051
      %v1108 = vpop.f32.mrf.mxu0
      %v1109 = vadd.f32 0.0, %v1108
      %v1110 = vpop.f32.mrf.mxu0
      %v1111 = vpop.f32.mrf.mxu0
      %v1112 = vadd.f32 0.0, %v1111
      %v1113 = vpop.f32.mrf.mxu0
      %1114 = vmatprep.mubr.bf16.mxu0 0
      %1115 = vmatmul.mubr.bf16.gmra.mxu0 %v1054
      %v1116 = vpop.f32.mrf.mxu0
      %v1117 = vadd.f32 0.0, %v1116
      %v1118 = vpop.f32.mrf.mxu0
      %v1119 = vpop.f32.mrf.mxu0
      %v1120 = vadd.f32 0.0, %v1119
      %v1121 = vpop.f32.mrf.mxu0
      %1122 = vmatprep.mubr.bf16.mxu0 0
      %1123 = vmatmul.mubr.bf16.gmra.mxu0 %v1057
      %v1124 = vpop.f32.mrf.mxu0
      %v1125 = vadd.f32 0.0, %v1124
      %v1126 = vpop.f32.mrf.mxu0
      %v1127 = vpop.f32.mrf.mxu0
      %v1128 = vadd.f32 0.0, %v1127
      %v1129 = vpop.f32.mrf.mxu0
      %1130 = vmatprep.mubr.bf16.mxu0 0
      %1131 = vmatmul.mubr.bf16.gmra.mxu0 %v1060
      %v1132 = vpop.f32.mrf.mxu0
      %v1133 = vadd.f32 0.0, %v1132
      %v1134 = vpop.f32.mrf.mxu0
      %v1135 = vpop.f32.mrf.mxu0
      %v1136 = vadd.f32 0.0, %v1135
      %v1137 = vpop.f32.mrf.mxu0
      %1138 = vmatprep.mubr.bf16.mxu0 0
      %1139 = vmatmul.mubr.bf16.gmra.mxu0 %v1063
      %v1140 = vpop.f32.mrf.mxu0
      %v1141 = vadd.f32 0.0, %v1140
      %v1142 = vpop.f32.mrf.mxu0
      %v1143 = vpop.f32.mrf.mxu0
      %v1144 = vadd.f32 0.0, %v1143
      %v1145 = vpop.f32.mrf.mxu0
      %1146 = vmatprep.mubr.bf16.mxu0 0
      %1147 = vmatmul.mubr.bf16.gmra.mxu0 %v1066
      %v1148 = vpop.f32.mrf.mxu0
      %v1149 = vadd.f32 0.0, %v1148
      %v1150 = vpop.f32.mrf.mxu0
      %v1151 = vpop.f32.mrf.mxu0
      %v1152 = vadd.f32 0.0, %v1151
      %v1153 = vpop.f32.mrf.mxu0
      %1154 = vmatprep.mubr.bf16.mxu0 0
      %1155 = vmatmul.mubr.bf16.gmra.mxu0 %v1069
      %v1156 = vpop.f32.mrf.mxu0
      %v1157 = vadd.f32 0.0, %v1156
      %v1158 = vpop.f32.mrf.mxu0
      %v1159 = vpop.f32.mrf.mxu0
      %v1160 = vadd.f32 0.0, %v1159
      %v1161 = vpop.f32.mrf.mxu0
      %1162 = vmatprep.mubr.bf16.mxu0 0
      %1163 = vmatmul.mubr.bf16.gmra.mxu0 %v1072
      %v1164 = vpop.f32.mrf.mxu0
      %v1165 = vadd.f32 0.0, %v1164
      %v1166 = vpop.f32.mrf.mxu0
      %v1167 = vpop.f32.mrf.mxu0
      %v1168 = vadd.f32 0.0, %v1167
      %v1169 = vpop.f32.mrf.mxu0
      %1170 = vdwg.mxu0
      %v1171 = vpack.c.bf16 %v1112, %v1109
      %v1172 = vpack.c.bf16 %v1120, %v1117
      %v1173 = vpack.c.bf16 %v1128, %v1125
      %v1174 = vpack.c.bf16 %v1136, %v1133
      %v1175 = vpack.c.bf16 %v1144, %v1141
      %v1176 = vpack.c.bf16 %v1152, %v1149
      %v1177 = vpack.c.bf16 %v1160, %v1157
      %v1178 = vpack.c.bf16 %v1168, %v1165
      %v1179 = vld [vmem:[%s2 + $0x4] sm:$0x1]
      %v1180 = vpack.c.bf16 %v1179, %v1179
      %v1182 = vpack.i.b16 %v1180, %v1180
      %v1184 = vlaneseq
      %v1185 = vshrl.u32 %v1184, 7
      %v1186 = vsub.s32 0, %v1185
      %v1187 = vrot.slane %v1182, %v1186
      %v1188 = vadd.bf16 %v1171, %v1187
      %v1189 = vadd.bf16 %v1172, %v1187
      %v1190 = vadd.bf16 %v1173, %v1187
      %v1191 = vadd.bf16 %v1174, %v1187
      %v1192 = vadd.bf16 %v1175, %v1187
      %v1193 = vadd.bf16 %v1176, %v1187
      %v1194 = vadd.bf16 %v1177, %v1187
      %v1195 = vadd.bf16 %v1178, %v1187
      %v1196 = vmax.bf16 %v1188, 0
      %v1197 = vmax.bf16 %v1189, 0
      %v1198 = vmax.bf16 %v1190, 0
      %v1199 = vmax.bf16 %v1191, 0
      %v1200 = vmax.bf16 %v1192, 0
      %v1201 = vmax.bf16 %v1193, 0
      %v1202 = vmax.bf16 %v1194, 0
      %v1203 = vmax.bf16 %v1195, 0
      %s1204 = scalar_lea.vmem %s1, 160
      %v1205 = vld [vmem:[%s1204] sm:$0xf]
      %v1206 = vld [vmem:[%s1204 + $0x4] sm:$0xf]
      %v1207 = vld [vmem:[%s1204 + $0x8] sm:$0xf]
      %v1208 = vld [vmem:[%s1204 + $0xc] sm:$0xf]
      %v1209 = vld [vmem:[%s1204 + $0x10] sm:$0xf]
      %v1210 = vld [vmem:[%s1204 + $0x14] sm:$0xf]
      %v1211 = vld [vmem:[%s1204 + $0x18] sm:$0xf]
      %v1212 = vld [vmem:[%s1204 + $0x1c] sm:$0xf]
      %v1221 = vunpack.c.l.b16 %v1205
      %v1222 = vunpack.c.l.b16 %v1206
      %v1223 = vunpack.c.l.b16 %v1207
      %v1224 = vunpack.c.l.b16 %v1208
      %v1225 = vunpack.c.l.b16 %v1209
      %v1226 = vunpack.c.l.b16 %v1210
      %v1227 = vunpack.c.l.b16 %v1211
      %v1228 = vunpack.c.l.b16 %v1212
      %v1229 = vpack.c.b16 %v1222, %v1221
      %v1230 = vpack.c.b16 %v1224, %v1223
      %v1231 = vpack.c.b16 %v1226, %v1225
      %v1232 = vpack.c.b16 %v1228, %v1227
      %v1238 = vsel %vm285, %v1196, 0
      %v1241 = vsel %vm285, %v1197, 0
      %v1244 = vsel %vm285, %v1198, 0
      %v1247 = vsel %vm285, %v1199, 0
      %v1250 = vsel %vm285, %v1200, 0
      %v1253 = vsel %vm285, %v1201, 0
      %v1256 = vsel %vm285, %v1202, 0
      %v1259 = vsel %vm285, %v1203, 0
      %1261 = vmatprep.subr.bf16.mxu0 0
      %1262 = vmatpush1.bf16.msra.mxu0 0
      %1263 = vmatprep.subr.bf16.mxu0 0
      %1264 = vmatpush1.bf16.msra.mxu0 0
      %1265 = vmatprep.subr.bf16.mxu0 0
      %1266 = vmatpush1.bf16.msra.mxu0 0
      %1267 = vmatprep.subr.bf16.mxu0 0
      %1268 = vmatpush1.bf16.msra.mxu0 0
      %1269 = vmatprep.subr.bf16.mxu0 0
      %1270 = vmatpush1.bf16.msra.mxu0 %v1232
      %1271 = vmatprep.subr.bf16.mxu0 0
      %1272 = vmatpush1.bf16.msra.mxu0 %v1231
      %1273 = vmatprep.subr.bf16.mxu0 0
      %1274 = vmatpush1.bf16.msra.mxu0 %v1230
      %1275 = vmatprep.subr.bf16.mxu0 0
      %1276 = vmatpush1.bf16.msra.mxu0 %v1229
      %1277 = vmatprep.subr.bf16.mxu0 0
      %1278 = vmatpush2.bf16.msra.mxu0 0
      %1279 = vmatprep.subr.bf16.mxu0 0
      %1280 = vmatpush2.bf16.msra.mxu0 0
      %1281 = vmatprep.subr.bf16.mxu0 0
      %1282 = vmatpush2.bf16.msra.mxu0 0
      %1283 = vmatprep.subr.bf16.mxu0 0
      %1284 = vmatpush2.bf16.msra.mxu0 0
      %1285 = vmatprep.subr.bf16.mxu0 0
      %1286 = vmatpush2.bf16.msra.mxu0 0
      %1287 = vmatprep.subr.bf16.mxu0 0
      %1288 = vmatpush2.bf16.msra.mxu0 0
      %1289 = vmatprep.subr.bf16.mxu0 0
      %1290 = vmatpush2.bf16.msra.mxu0 0
      %1291 = vmatprep.subr.bf16.mxu0 0
      %1292 = vmatpush2.bf16.msra.mxu0 0
      %1293 = vmatprep.mubr.bf16.mxu0 0
      %1294 = vmatmul.mubr.bf16.gmra.mxu0 %v1238
      %v1295 = vpop.f32.mrf.mxu0
      %v1296 = vadd.f32 0.0, %v1295
      %v1297 = vpop.f32.mrf.mxu0
      %v1298 = vpop.f32.mrf.mxu0
      %v1299 = vadd.f32 0.0, %v1298
      %v1300 = vpop.f32.mrf.mxu0
      %1301 = vmatprep.mubr.bf16.mxu0 0
      %1302 = vmatmul.mubr.bf16.gmra.mxu0 %v1241
      %v1303 = vpop.f32.mrf.mxu0
      %v1304 = vadd.f32 0.0, %v1303
      %v1305 = vpop.f32.mrf.mxu0
      %v1306 = vpop.f32.mrf.mxu0
      %v1307 = vadd.f32 0.0, %v1306
      %v1308 = vpop.f32.mrf.mxu0
      %1309 = vmatprep.mubr.bf16.mxu0 0
      %1310 = vmatmul.mubr.bf16.gmra.mxu0 %v1244
      %v1311 = vpop.f32.mrf.mxu0
      %v1312 = vadd.f32 0.0, %v1311
      %v1313 = vpop.f32.mrf.mxu0
      %v1314 = vpop.f32.mrf.mxu0
      %v1315 = vadd.f32 0.0, %v1314
      %v1316 = vpop.f32.mrf.mxu0
      %1317 = vmatprep.mubr.bf16.mxu0 0
      %1318 = vmatmul.mubr.bf16.gmra.mxu0 %v1247
      %v1319 = vpop.f32.mrf.mxu0
      %v1320 = vadd.f32 0.0, %v1319
      %v1321 = vpop.f32.mrf.mxu0
      %v1322 = vpop.f32.mrf.mxu0
      %v1323 = vadd.f32 0.0, %v1322
      %v1324 = vpop.f32.mrf.mxu0
      %1325 = vmatprep.mubr.bf16.mxu0 0
      %1326 = vmatmul.mubr.bf16.gmra.mxu0 %v1250
      %v1327 = vpop.f32.mrf.mxu0
      %v1328 = vadd.f32 0.0, %v1327
      %v1329 = vpop.f32.mrf.mxu0
      %v1330 = vpop.f32.mrf.mxu0
      %v1331 = vadd.f32 0.0, %v1330
      %v1332 = vpop.f32.mrf.mxu0
      %1333 = vmatprep.mubr.bf16.mxu0 0
      %1334 = vmatmul.mubr.bf16.gmra.mxu0 %v1253
      %v1335 = vpop.f32.mrf.mxu0
      %v1336 = vadd.f32 0.0, %v1335
      %v1337 = vpop.f32.mrf.mxu0
      %v1338 = vpop.f32.mrf.mxu0
      %v1339 = vadd.f32 0.0, %v1338
      %v1340 = vpop.f32.mrf.mxu0
      %1341 = vmatprep.mubr.bf16.mxu0 0
      %1342 = vmatmul.mubr.bf16.gmra.mxu0 %v1256
      %v1343 = vpop.f32.mrf.mxu0
      %v1344 = vadd.f32 0.0, %v1343
      %v1345 = vpop.f32.mrf.mxu0
      %v1346 = vpop.f32.mrf.mxu0
      %v1347 = vadd.f32 0.0, %v1346
      %v1348 = vpop.f32.mrf.mxu0
      %1349 = vmatprep.mubr.bf16.mxu0 0
      %1350 = vmatmul.mubr.bf16.gmra.mxu0 %v1259
      %v1351 = vpop.f32.mrf.mxu0
      %v1352 = vadd.f32 0.0, %v1351
      %v1353 = vpop.f32.mrf.mxu0
      %v1354 = vpop.f32.mrf.mxu0
      %v1355 = vadd.f32 0.0, %v1354
      %v1356 = vpop.f32.mrf.mxu0
      %1357 = vdwg.mxu0
      %v1358 = vpack.c.bf16 %v1299, %v1296
      %v1359 = vpack.c.bf16 %v1307, %v1304
      %v1360 = vpack.c.bf16 %v1315, %v1312
      %v1361 = vpack.c.bf16 %v1323, %v1320
      %v1362 = vpack.c.bf16 %v1331, %v1328
      %v1363 = vpack.c.bf16 %v1339, %v1336
      %v1364 = vpack.c.bf16 %v1347, %v1344
      %v1365 = vpack.c.bf16 %v1355, %v1352
      %v1366 = vld [vmem:[%s2 + $0x5] sm:$0x1]
      %v1367 = vpack.c.bf16 %v1366, %v1366
      %v1369 = vpack.i.b16 %v1367, %v1367
      %v1371 = vlaneseq
      %v1372 = vshrl.u32 %v1371, 7
      %v1373 = vsub.s32 0, %v1372
      %v1374 = vrot.slane %v1369, %v1373
      %v1375 = vadd.bf16 %v1358, %v1374
      %v1376 = vadd.bf16 %v1359, %v1374
      %v1377 = vadd.bf16 %v1360, %v1374
      %v1378 = vadd.bf16 %v1361, %v1374
      %v1379 = vadd.bf16 %v1362, %v1374
      %v1380 = vadd.bf16 %v1363, %v1374
      %v1381 = vadd.bf16 %v1364, %v1374
      %v1382 = vadd.bf16 %v1365, %v1374
      %v1383 = vadd.bf16 %v1375, %v1009
      %v1384 = vadd.bf16 %v1376, %v1010
      %v1385 = vadd.bf16 %v1377, %v1011
      %v1386 = vadd.bf16 %v1378, %v1012
      %v1387 = vadd.bf16 %v1379, %v1013
      %v1388 = vadd.bf16 %v1380, %v1014
      %v1389 = vadd.bf16 %v1381, %v1015
      %v1390 = vadd.bf16 %v1382, %v1016
      %v1391 = vmax.bf16 %v1383, 0
      %v1392 = vmax.bf16 %v1384, 0
      %v1393 = vmax.bf16 %v1385, 0
      %v1394 = vmax.bf16 %v1386, 0
      %v1395 = vmax.bf16 %v1387, 0
      %v1396 = vmax.bf16 %v1388, 0
      %v1397 = vmax.bf16 %v1389, 0
      %v1398 = vmax.bf16 %v1390, 0
      %v1399 = vld [vmem:[%s3] sm:$0xf]
      %v1400 = vld [vmem:[%s3 + $0x4] sm:$0xf]
      %v1401 = vld [vmem:[%s3 + $0x8] sm:$0xf]
      %v1402 = vld [vmem:[%s3 + $0xc] sm:$0xf]
      %v1403 = vld [vmem:[%s3 + $0x10] sm:$0xf]
      %v1404 = vld [vmem:[%s3 + $0x14] sm:$0xf]
      %v1405 = vld [vmem:[%s3 + $0x18] sm:$0xf]
      %v1406 = vld [vmem:[%s3 + $0x1c] sm:$0xf]
      %v1407 = vld [vmem:[%s4] sm:$0x1]
      %v1409 = vlaneseq
      %v1410 = vshrl.u32 %v1409, 7
      %v1411 = vsub.s32 0, %v1410
      %v1412 = vrot.slane %v1407, %v1411
      %v1422 = vunpack.c.l.b16 %v1399
      %v1423 = vunpack.c.l.b16 %v1400
      %v1424 = vunpack.c.l.b16 %v1401
      %v1425 = vunpack.c.l.b16 %v1402
      %v1426 = vunpack.c.l.b16 %v1403
      %v1427 = vunpack.c.l.b16 %v1404
      %v1428 = vunpack.c.l.b16 %v1405
      %v1429 = vunpack.c.l.b16 %v1406
      %v1430 = vpack.c.b16 %v1423, %v1422
      %v1431 = vpack.c.b16 %v1425, %v1424
      %v1432 = vpack.c.b16 %v1427, %v1426
      %v1433 = vpack.c.b16 %v1429, %v1428
      %v1439 = vsel %vm285, %v1391, 0
      %v1442 = vsel %vm285, %v1392, 0
      %v1445 = vsel %vm285, %v1393, 0
      %v1448 = vsel %vm285, %v1394, 0
      %v1451 = vsel %vm285, %v1395, 0
      %v1454 = vsel %vm285, %v1396, 0
      %v1457 = vsel %vm285, %v1397, 0
      %v1460 = vsel %vm285, %v1398, 0
      %1462 = vmatprep.subr.bf16.mxu0 0
      %1463 = vmatpush1.bf16.msra.mxu0 0
      %1464 = vmatprep.subr.bf16.mxu0 0
      %1465 = vmatpush1.bf16.msra.mxu0 0
      %1466 = vmatprep.subr.bf16.mxu0 0
      %1467 = vmatpush1.bf16.msra.mxu0 0
      %1468 = vmatprep.subr.bf16.mxu0 0
      %1469 = vmatpush1.bf16.msra.mxu0 0
      %1470 = vmatprep.subr.bf16.mxu0 0
      %1471 = vmatpush1.bf16.msra.mxu0 %v1433
      %1472 = vmatprep.subr.bf16.mxu0 0
      %1473 = vmatpush1.bf16.msra.mxu0 %v1432
      %1474 = vmatprep.subr.bf16.mxu0 0
      %1475 = vmatpush1.bf16.msra.mxu0 %v1431
      %1476 = vmatprep.subr.bf16.mxu0 0
      %1477 = vmatpush1.bf16.msra.mxu0 %v1430
      %1478 = vmatprep.subr.bf16.mxu0 0
      %1479 = vmatpush2.bf16.msra.mxu0 0
      %1480 = vmatprep.subr.bf16.mxu0 0
      %1481 = vmatpush2.bf16.msra.mxu0 0
      %1482 = vmatprep.subr.bf16.mxu0 0
      %1483 = vmatpush2.bf16.msra.mxu0 0
      %1484 = vmatprep.subr.bf16.mxu0 0
      %1485 = vmatpush2.bf16.msra.mxu0 0
      %1486 = vmatprep.subr.bf16.mxu0 0
      %1487 = vmatpush2.bf16.msra.mxu0 0
      %1488 = vmatprep.subr.bf16.mxu0 0
      %1489 = vmatpush2.bf16.msra.mxu0 0
      %1490 = vmatprep.subr.bf16.mxu0 0
      %1491 = vmatpush2.bf16.msra.mxu0 0
      %1492 = vmatprep.subr.bf16.mxu0 0
      %1493 = vmatpush2.bf16.msra.mxu0 0
      %1494 = vmatprep.mubr.bf16.mxu0 0
      %1495 = vmatmul.mubr.bf16.gmra.mxu0 %v1439
      %v1496 = vpop.f32.mrf.mxu0
      %v1497 = vadd.f32 %v1412, %v1496
      %v1498 = vpop.f32.mrf.mxu0
      %v1499 = vpop.f32.mrf.mxu0
      %v1500 = vadd.f32 %v1412, %v1499
      %v1501 = vpop.f32.mrf.mxu0
      %1502 = vmatprep.mubr.bf16.mxu0 0
      %1503 = vmatmul.mubr.bf16.gmra.mxu0 %v1442
      %v1504 = vpop.f32.mrf.mxu0
      %v1505 = vadd.f32 %v1412, %v1504
      %v1506 = vpop.f32.mrf.mxu0
      %v1507 = vpop.f32.mrf.mxu0
      %v1508 = vadd.f32 %v1412, %v1507
      %v1509 = vpop.f32.mrf.mxu0
      %1510 = vmatprep.mubr.bf16.mxu0 0
      %1511 = vmatmul.mubr.bf16.gmra.mxu0 %v1445
      %v1512 = vpop.f32.mrf.mxu0
      %v1513 = vadd.f32 %v1412, %v1512
      %v1514 = vpop.f32.mrf.mxu0
      %v1515 = vpop.f32.mrf.mxu0
      %v1516 = vadd.f32 %v1412, %v1515
      %v1517 = vpop.f32.mrf.mxu0
      %1518 = vmatprep.mubr.bf16.mxu0 0
      %1519 = vmatmul.mubr.bf16.gmra.mxu0 %v1448
      %v1520 = vpop.f32.mrf.mxu0
      %v1521 = vadd.f32 %v1412, %v1520
      %v1522 = vpop.f32.mrf.mxu0
      %v1523 = vpop.f32.mrf.mxu0
      %v1524 = vadd.f32 %v1412, %v1523
      %v1525 = vpop.f32.mrf.mxu0
      %1526 = vmatprep.mubr.bf16.mxu0 0
      %1527 = vmatmul.mubr.bf16.gmra.mxu0 %v1451
      %v1528 = vpop.f32.mrf.mxu0
      %v1529 = vadd.f32 %v1412, %v1528
      %v1530 = vpop.f32.mrf.mxu0
      %v1531 = vpop.f32.mrf.mxu0
      %v1532 = vadd.f32 %v1412, %v1531
      %v1533 = vpop.f32.mrf.mxu0
      %1534 = vmatprep.mubr.bf16.mxu0 0
      %1535 = vmatmul.mubr.bf16.gmra.mxu0 %v1454
      %v1536 = vpop.f32.mrf.mxu0
      %v1537 = vadd.f32 %v1412, %v1536
      %v1538 = vpop.f32.mrf.mxu0
      %v1539 = vpop.f32.mrf.mxu0
      %v1540 = vadd.f32 %v1412, %v1539
      %v1541 = vpop.f32.mrf.mxu0
      %1542 = vmatprep.mubr.bf16.mxu0 0
      %1543 = vmatmul.mubr.bf16.gmra.mxu0 %v1457
      %v1544 = vpop.f32.mrf.mxu0
      %v1545 = vadd.f32 %v1412, %v1544
      %v1546 = vpop.f32.mrf.mxu0
      %v1547 = vpop.f32.mrf.mxu0
      %v1548 = vadd.f32 %v1412, %v1547
      %v1549 = vpop.f32.mrf.mxu0
      %1550 = vmatprep.mubr.bf16.mxu0 0
      %1551 = vmatmul.mubr.bf16.gmra.mxu0 %v1460
      %v1552 = vpop.f32.mrf.mxu0
      %v1553 = vadd.f32 %v1412, %v1552
      %v1554 = vpop.f32.mrf.mxu0
      %v1555 = vpop.f32.mrf.mxu0
      %v1556 = vadd.f32 %v1412, %v1555
      %v1557 = vpop.f32.mrf.mxu0
      %1558 = vdwg.mxu0
      %vm1559 = vcmask 261120
      %1560 = vst.msk [vmem:[%s226] sm:$0xff] %vm1559, %v1497
      %1561 = vst.msk [vmem:[%s226 + $0x8] sm:$0xff] %vm1559, %v1500
      %1562 = vst.msk [vmem:[%s226 + $0x10] sm:$0xff] %vm1559, %v1505
      %1563 = vst.msk [vmem:[%s226 + $0x18] sm:$0xff] %vm1559, %v1508
      %1564 = vst.msk [vmem:[%s226 + $0x20] sm:$0xff] %vm1559, %v1513
      %1565 = vst.msk [vmem:[%s226 + $0x28] sm:$0xff] %vm1559, %v1516
      %1566 = vst.msk [vmem:[%s226 + $0x30] sm:$0xff] %vm1559, %v1521
      %1567 = vst.msk [vmem:[%s226 + $0x38] sm:$0xff] %vm1559, %v1524
      %1568 = vst.msk [vmem:[%s226 + $0x40] sm:$0xff] %vm1559, %v1529
      %1569 = vst.msk [vmem:[%s226 + $0x48] sm:$0xff] %vm1559, %v1532
      %1570 = vst.msk [vmem:[%s226 + $0x50] sm:$0xff] %vm1559, %v1537
      %1571 = vst.msk [vmem:[%s226 + $0x58] sm:$0xff] %vm1559, %v1540
      %1572 = vst.msk [vmem:[%s226 + $0x60] sm:$0xff] %vm1559, %v1545
      %1573 = vst.msk [vmem:[%s226 + $0x68] sm:$0xff] %vm1559, %v1548
      %1574 = vst.msk [vmem:[%s226 + $0x70] sm:$0xff] %vm1559, %v1553
      %1575 = vst.msk [vmem:[%s226 + $0x78] sm:$0xff] %vm1559, %v1556
      %s1576 = smul.u32 16, %s16
      %p1577 = scmp.lt.s32.totalorder %s1576, 31
      %s1578 = scalar_select %p1577, %s1576, 31
      %s1579 = smul.addr %s1578, 8
      %s1580 = scalar_lea.vmem %s5, %s1579
      // Predicated region
      $region41: #{_resnet_forward_impl.1} parent=39 // pred_check
        %p1581 = pneg %p144
      $region42: #{_resnet_forward_impl.1} parent=39 // pred_check_branch
        %1583 = sbr.rel (%p1581) target = $region44
      $region43: #{_resnet_forward_impl.1} parent=39 // pred_region
        %s1584 = smul.u32 16, %s16
      $region44: #{_resnet_forward_impl.1} parent=39 // pred_fallthru
        _
    $region40: #{_resnet_forward_impl.1} parent=5 // pred_fallthru
      _
    %p1585 = scmp.le.s32.totalorder 2, %s11
    // Predicated region
    $region45: #{_resnet_forward_impl.1} parent=5 // pred_check
      %p1586 = pneg %p1585
    $region46: #{_resnet_forward_impl.1} parent=5 // pred_check_branch
      %1588 = sbr.rel (%p1586) target = $region48
    $region47: #{_resnet_forward_impl.1} parent=5 // pred_region
      %s1589 = ssub.s32 %s11, 2
      // Predicated region
      $region49: #{_resnet_forward_impl.1} parent=47 // pred_check
        %p1590 = pneg %p150
      $region50: #{_resnet_forward_impl.1} parent=47 // pred_check_branch
        %1592 = sbr.rel (%p1590) target = $region52
      $region51: #{_resnet_forward_impl.1} parent=47 // pred_region
        %s1593 = smul.u32 16, %s17
        %p1594 = scmp.lt.s32.totalorder %s1593, 31
        %s1595 = scalar_select %p1594, %s1593, 31
        %s1596 = smul.addr %s1595, 8
        %s1597 = scalar_lea.vmem %s5, %s1596
      $region52: #{_resnet_forward_impl.1} parent=47 // pred_fallthru
        _
    $region48: #{_resnet_forward_impl.1} parent=5 // pred_fallthru
      _
  $region6: #{_resnet_forward_impl.1} parent=0 // loop_footer
    %s15 = sadd.s32 1, %s11
  $region7: #{_resnet_forward_impl.1} parent=0 // loop_footer_branch
    %10 = sbr.rel target = $region3
  $region8: #{_resnet_forward_impl.1} parent=0 // loop_exit
    _

</llo_original>
